<compile_context>
chip_gen: v5e
topology: v5e:2x2
jax: 0.10.0
libtpu: 0.0.40
codegen_flags: <defaults>
</compile_context>

<pallas_src>
import functools
import math

import jax
import jax.numpy as jnp
import numpy as np
from jax.experimental import pallas as pl
from jax.experimental.pallas import tpu as pltpu


# ---------------------------------------------------------------------------
# Budgets / small helpers
# ---------------------------------------------------------------------------
def _round_down(x, m):
    return (x // m) * m


def _round_up(x, m):
    return -(-x // m) * m


@functools.lru_cache(maxsize=None)
def _budgets():
    """(vmem_limit_bytes, target_block_bytes), tuned per TPU generation."""
    vmem = None
    try:
        info = pltpu.get_tpu_info()
        vmem = int(getattr(info, "vmem_capacity_bytes"))
    except Exception:
        vmem = None
    if vmem is not None and vmem >= 128 * 1024 * 1024:
        # v5e / v6e: 128 MiB VMEM -> generous scoped limit, bigger tiles.
        return 64 * 1024 * 1024, 6 * 1024 * 1024
    # v7x (64 MiB physical VMEM) or unknown: stay conservative.
    return 32 * 1024 * 1024, 4 * 1024 * 1024


def _cparams(n_grid):
    vmem_limit, _ = _budgets()
    return pltpu.CompilerParams(
        dimension_semantics=("parallel",) * n_grid,
        vmem_limit_bytes=vmem_limit,
    )


def _copy_cost(nbytes):
    # Pure bandwidth-bound data movement: read once + write once.
    return pl.CostEstimate(flops=0, transcendentals=0, bytes_accessed=2 * int(nbytes))


# ---------------------------------------------------------------------------
# Kernels
# ---------------------------------------------------------------------------
def _copy_kernel(x_ref, o_ref):
    # Permutation fully expressed by the BlockSpec index_maps: straight VMEM copy.
    o_ref[...] = x_ref[...]


def _block_transpose_kernel(x_ref, o_ref, *, perm):
    o_ref[...] = jnp.transpose(x_ref[...], perm)


def _nchw_to_nhwc_folded_kernel(x_ref, o_ref):
    # (1, C, tH, tW) -> (1, tH, tW*C): lane-dense store (full 128-lane vst, contiguous
    # writeback DMA).
    y = jnp.transpose(x_ref[...], (0, 2, 3, 1))          # (1, tH, tW, C)
    o_ref[...] = y.reshape(o_ref.shape)


# ---------------------------------------------------------------------------
# Path A: permutation keeps the last two axes fixed -> pure BlockSpec copy.
# ---------------------------------------------------------------------------
def _permute_leading_axes(x, dims):
    ndim = x.ndim
    n_lead = ndim - 2
    out_shape = tuple(x.shape[d] for d in dims)
    h, w = x.shape[-2], x.shape[-1]
    itemsize = x.dtype.itemsize
    _, target = _budgets()

    # (h, w) tiles: multiples of (8, 128) or the full extents.
    tw = w
    if 8 * w * itemsize > target and w > 128:
        tw = max(128, _round_down(target // (8 * itemsize), 128))
    th = min(h, max(8, _round_down(target // max(1, tw * itemsize), 8)))

    # Grow along the innermost output leading axis when the whole plane fits
    # (keeps the kernel a pure copy; the input side becomes a strided window DMA).
    a_grow = dims[n_lead - 1]                 # its input axis (always < ndim - 2 here)
    grow_ext = out_shape[n_lead - 1]
    tb = 1
    if th >= h and tw >= w:
        th, tw = h, w
        plane_bytes = h * w * itemsize
        cap = min(grow_ext, max(1, target // max(1, plane_bytes)))
        for d in range(cap, 0, -1):           # largest divisor <= cap (no ragged leading blocks)
            if grow_ext % d == 0:
                tb = d
                break

    def make_grid():
        return tuple(out_shape[:n_lead - 1]) + (
            pl.cdiv(grow_ext, tb), pl.cdiv(h, th), pl.cdiv(w, tw))

    grid = make_grid()
    # Megacore (v7x has 2 TensorCores): make sure there are >= 2 steps when possible.
    if math.prod(grid) == 1 and h >= 16:
        th = _round_up(pl.cdiv(h, 2), 8)
        grid = make_grid()

    in_block = [None] * ndim
    in_block[a_grow] = tb
    in_block[ndim - 2] = th
    in_block[ndim - 1] = tw
    out_block = [None] * ndim
    out_block[n_lead - 1] = tb
    out_block[ndim - 2] = th
    out_block[ndim - 1] = tw

    def in_index(*g):
        idx = [0] * ndim
        for a in range(ndim - 2):
            idx[a] = g[dims.index(a)]
        idx[ndim - 2] = g[n_lead]
        idx[ndim - 1] = g[n_lead + 1]
        return tuple(idx)

    return pl.pallas_call(
        _copy_kernel,
        out_shape=jax.ShapeDtypeStruct(out_shape, x.dtype),
        grid=grid,
        in_specs=[pl.BlockSpec(tuple(in_block), in_index)],
        out_specs=pl.BlockSpec(tuple(out_block), lambda *g: g),
        compiler_params=_cparams(len(grid)),
        cost_estimate=_copy_cost(x.size * itemsize),
    )(x)


# ---------------------------------------------------------------------------
# Batched transpose of the last two axes of a 3-D array: (B, M, N) -> (B, N, M).
# Used for NCHW<->NHWC via flattened spatial dims (wrapper reshapes are metadata-only).
# ---------------------------------------------------------------------------
def _choose_t2_tiles(m, n, itemsize):
    _, target = _budgets()
    tm, tn = m, n
    # Each tile is either the full extent or a multiple of 128, satisfying the (8,128)
    # rule on both the input and the (transposed) output block.
    while tm * tn * itemsize > target and (tm > 128 or tn > 128):
        if tm >= tn and tm > 128:
            tm = max(128, _round_down(tm // 2, 128))
        else:
            tn = max(128, _round_down(tn // 2, 128))
    return tm, tn


def _batched_transpose_last2(x3):
    b, m, n = x3.shape
    itemsize = x3.dtype.itemsize
    tm, tn = _choose_t2_tiles(m, n, itemsize)
    # Megacore: if the whole thing is one grid step, split the bigger axis in two.
    if b * pl.cdiv(m, tm) * pl.cdiv(n, tn) == 1:
        if m >= 256:
            tm = _round_up(pl.cdiv(m, 2), 128)
        elif n >= 256:
            tn = _round_up(pl.cdiv(n, 2), 128)
    grid = (b, pl.cdiv(m, tm), pl.cdiv(n, tn))
    return pl.pallas_call(
        functools.partial(_block_transpose_kernel, perm=(0, 2, 1)),
        out_shape=jax.ShapeDtypeStruct((b, n, m), x3.dtype),
        grid=grid,
        in_specs=[pl.BlockSpec((1, tm, tn), lambda bi, i, j: (bi, i, j))],
        out_specs=pl.BlockSpec((1, tn, tm), lambda bi, i, j: (bi, j, i)),
        compiler_params=_cparams(len(grid)),
        cost_estimate=_copy_cost(x3.size * itemsize),
    )(x3)


# ---------------------------------------------------------------------------
# Path B: NCHW -> NHWC (dims == (0, 2, 3, 1)), the hot path for feature maps.
# ---------------------------------------------------------------------------
def _nchw_tiles(c, h, w, itemsize):
    _, target = _budgets()
    tw = w
    if 8 * c * w * itemsize > target and w > 128:
        tw = max(128, _round_down(target // (8 * c * itemsize), 128))
    th = min(h, max(8, _round_down(target // max(1, c * tw * itemsize), 8)))
    return th, tw


def _build_nchw_folded_call(n, c, h, w, th, tw, dtype):
    grid = (n, pl.cdiv(h, th), pl.cdiv(w, tw))
    nbytes = n * c * h * w * np.dtype(dtype).itemsize
    return pl.pallas_call(
        _nchw_to_nhwc_folded_kernel,
        out_shape=jax.ShapeDtypeStruct((n, h, w * c), dtype),
        grid=grid,
        in_specs=[pl.BlockSpec((1, c, th, tw), lambda b, i, j: (b, 0, i, j))],
        out_specs=pl.BlockSpec((1, th, tw * c), lambda b, i, j: (b, i, j)),
        compiler_params=_cparams(len(grid)),
        cost_estimate=_copy_cost(nbytes),
    )


def _build_nchw_direct_call(n, c, h, w, th, tw, dtype):
    grid = (n, pl.cdiv(h, th), pl.cdiv(w, tw))
    nbytes = n * c * h * w * np.dtype(dtype).itemsize
    return pl.pallas_call(
        functools.partial(_block_transpose_kernel, perm=(0, 2, 3, 1)),
        out_shape=jax.ShapeDtypeStruct((n, h, w, c), dtype),
        grid=grid,
        in_specs=[pl.BlockSpec((1, c, th, tw), lambda b, i, j: (b, 0, i, j))],
        out_specs=pl.BlockSpec((1, th, tw, c), lambda b, i, j: (b, i, j, 0)),
        compiler_params=_cparams(len(grid)),
        cost_estimate=_copy_cost(nbytes),
    )


@functools.lru_cache(maxsize=None)
def _folded_store_supported(n, c, h, w, th, tw, dtype):
    """One-time (cached) Mosaic compile probe on *abstract* inputs for the lane-dense
    folded-output kernel.  Runs outside any caller's trace, so an unsupported in-kernel
    (tH, tW, C) -> (tH, tW*C) fold degrades to the direct kernel instead of failing the
    caller's jit compile."""
    call = _build_nchw_folded_call(n, c, h, w, th, tw, dtype)
    try:
        jax.jit(call).lower(jax.ShapeDtypeStruct((n, c, h, w), dtype)).compile()
        return True
    except Exception:  # any lowering/compile failure => use the proven fallback
        return False


def _permute_nchw_to_nhwc(x):
    n, c, h, w = x.shape
    itemsize = x.dtype.itemsize

    if c >= 128:
        # Flattened-spatial batched transpose: (N, C, H*W) -> (N, H*W, C).
        # Both the load and the store are lane-dense; reshapes are metadata-only.
        y = _batched_transpose_last2(x.reshape(n, c, h * w))
        return y.reshape(n, h, w, c)

    th, tw = _nchw_tiles(c, h, w, itemsize)
    if n * pl.cdiv(h, th) * pl.cdiv(w, tw) == 1 and h >= 16:
        th = _round_up(pl.cdiv(h, 2), 8)          # >= 2 steps so both v7x TCs get work

    if w * c >= 128 and _folded_store_supported(n, c, h, w, th, tw, x.dtype):
        out = _build_nchw_folded_call(n, c, h, w, th, tw, x.dtype)(x)
        return out.reshape(n, h, w, c)            # metadata-only
    return _build_nchw_direct_call(n, c, h, w, th, tw, x.dtype)(x)


# ---------------------------------------------------------------------------
# Path C: generic fallback for any other permutation.
# Blocks cover the union of the input's and the output's last-two axes (full extents or
# 8/128-multiple tiles, so every BlockSpec obeys the (8,128) rule); all other axes are
# walked by the grid; over-budget blocks are tiled down.
# ---------------------------------------------------------------------------
def _permute_general(x, dims):
    ndim = x.ndim
    out_shape = tuple(x.shape[d] for d in dims)
    itemsize = x.dtype.itemsize
    _, target = _budgets()

    u_set = {ndim - 2, ndim - 1, dims[-2], dims[-1]}
    u_in = sorted(u_set)                          # block axes, input order
    u_out = [d for d in dims if d in u_set]       # block axes, output order
    perm = tuple(u_in.index(a) for a in u_out)

    # An axis that is the *last* dim of either block needs 128-multiple tiles (or full);
    # other block axes need 8-multiples (or full).
    def quantum(a):
        return 128 if a in (ndim - 1, dims[-1]) else 8

    tile = {a: x.shape[a] for a in u_in}

    def block_bytes():
        b = itemsize
        for a in u_in:
            b *= tile[a]
        return b

    while block_bytes() > target and any(tile[a] > quantum(a) for a in u_in):
        a = max((a for a in u_in if tile[a] > quantum(a)), key=lambda a: tile[a])
        q = quantum(a)
        tile[a] = max(q, _round_down(tile[a] // 2, q))

    lead_out = [j for j in range(ndim) if dims[j] not in u_set]   # walked one at a time
    k = len(lead_out)
    grid = tuple(out_shape[j] for j in lead_out) + tuple(
        pl.cdiv(x.shape[a], tile[a]) for a in u_out)

    def in_index(*g):
        idx = [0] * ndim
        for t, j in enumerate(lead_out):
            idx[dims[j]] = g[t]
        for t, a in enumerate(u_out):
            idx[a] = g[k + t]
        return tuple(idx)

    def out_index(*g):
        idx = [0] * ndim
        for t, j in enumerate(lead_out):
            idx[j] = g[t]
        for t, a in enumerate(u_out):
            idx[dims.index(a)] = g[k + t]
        return tuple(idx)

    in_block = tuple(tile[a] if a in u_set else None for a in range(ndim))
    out_block = tuple(tile[dims[j]] if dims[j] in u_set else None for j in range(ndim))

    return pl.pallas_call(
        functools.partial(_block_transpose_kernel, perm=perm),
        out_shape=jax.ShapeDtypeStruct(out_shape, x.dtype),
        grid=grid,
        in_specs=[pl.BlockSpec(in_block, in_index)],
        out_specs=pl.BlockSpec(out_block, out_index),
        compiler_params=_cparams(len(grid)),
        cost_estimate=_copy_cost(x.size * itemsize),
    )(x)


# ---------------------------------------------------------------------------
# Public wrapper: Pallas equivalent of torch.permute(x, dims).
# ---------------------------------------------------------------------------
def permutation(x: jax.Array, dims) -> jax.Array:
    dims = tuple(int(d) for d in dims)
    ndim = x.ndim
    if sorted(dims) != list(range(ndim)):
        raise ValueError("dims must be a permutation of range(x.ndim)")

    if dims == tuple(range(ndim)):
        return x                                           # identity: no data movement

    if ndim >= 3 and dims[-2:] == (ndim - 2, ndim - 1):
        return _permute_leading_axes(x, dims)              # pure BlockSpec copy

    if ndim == 4 and dims == (0, 2, 3, 1):
        return _permute_nchw_to_nhwc(x)                    # NCHW -> NHWC hot path

    if ndim == 4 and dims == (0, 3, 1, 2):                 # NHWC -> NCHW
        n, h, w, c = x.shape
        y = _batched_transpose_last2(x.reshape(n, h * w, c))
        return y.reshape(n, c, h, w)

    return _permute_general(x, dims)


class Permutation:
    """Drop-in equivalent of the PyTorch Permutation module."""

    def __init__(self, dims):
        self.dims = tuple(dims)

    def __call__(self, x):
        return permutation(x, self.dims)


if __name__ == "__main__":
    key = jax.random.PRNGKey(0)
    keys = jax.random.split(key, 5)

    def check(x, dims, name):
        out = jax.block_until_ready(permutation(x, dims))
        ref = jnp.transpose(x, dims)
        assert out.shape == ref.shape and out.dtype == ref.dtype, name
        assert bool(jnp.array_equal(out, ref)), name

    # Hot path (matches the vkit usage): NCHW -> NHWC feature-map permutation.
    x1 = jax.random.normal(keys[0], (2, 4, 16, 16), dtype=jnp.float32)
    check(x1, (0, 2, 3, 1), "nchw->nhwc c=4")

    # W*C = 128: exercises the lane-dense folded-output kernel (probe-gated).
    x2 = jax.random.normal(keys[1], (2, 8, 16, 16), dtype=jnp.float32)
    check(x2, (0, 2, 3, 1), "nchw->nhwc c=8 (lane-dense folded store)")
    check(x2.astype(jnp.bfloat16), (0, 2, 3, 1), "nchw->nhwc bf16")

    # Also under an outer jit: the capability probe is a cached AOT compile on abstract
    # inputs, so it cannot poison this trace.
    jit_fn = jax.jit(functools.partial(permutation, dims=(0, 2, 3, 1)))
    out_j = jax.block_until_ready(jit_fn(x2))
    assert bool(jnp.array_equal(out_j, jnp.transpose(x2, (0, 2, 3, 1)))), "jit nchw->nhwc"

    # Wide-channel variant: flattened (C, H*W) batched-transpose path.
    x3 = jax.random.normal(keys[2], (1, 128, 16, 16), dtype=jnp.float32)
    check(x3, (0, 2, 3, 1), "nchw->nhwc c=128 (flattened)")

    # Reverse direction: NHWC -> NCHW.
    x4 = jax.random.normal(keys[3], (2, 16, 16, 8), dtype=jnp.float32)
    check(x4, (0, 3, 1, 2), "nhwc->nchw")

    # Last two axes fixed: pure BlockSpec gather copy (with leading-axis block growth).
    check(x1, (1, 0, 2, 3), "leading-axes swap")

    # Generic fallback (last axis fixed, middle axes swapped).
    check(x1, (0, 2, 1, 3), "generic (0,2,1,3)")

    # Plain 2-D transpose through the generic path.
    x5 = jax.random.normal(keys[4], (128, 256), dtype=jnp.float32)
    check(x5, (1, 0), "2d transpose")

    print("KERNEL_OK")
</pallas_src>

<mosaic_0001>
module attributes {stable_mosaic.version = 11 : i64} {
  func.func @_block_transpose_kernel(%arg0: i32, %arg1: i32, %arg2: i32, %arg3: memref<1x4x16x16xf32, #tpu.memory_space<vmem>>, %arg4: memref<1x16x16x4xf32, #tpu.memory_space<vmem>>) attributes {dimension_semantics = [#tpu.dimension_semantics<parallel>, #tpu.dimension_semantics<parallel>, #tpu.dimension_semantics<parallel>], iteration_bounds = array<i64: 2, 1, 1>, scalar_prefetch = 0 : i64, scratch_operands = 0 : i64, tpu.core_type = #tpu.core_type<tc>, window_params = [{transform_indices = @transform_0, window_bounds = array<i64: 1, 4, 16, 16>}, {transform_indices = @transform_1, window_bounds = array<i64: 1, 16, 16, 4>}]} {
    %c0 = arith.constant 0 : index
    %c0_0 = arith.constant 0 : index
    %c0_1 = arith.constant 0 : index
    %c0_2 = arith.constant 0 : index
    %0 = vector.load %arg3[%c0, %c0_0, %c0_1, %c0_2] : memref<1x4x16x16xf32, #tpu.memory_space<vmem>>, vector<1x4x16x16xf32>
    %1 = tpu.transpose %0, [0, 2, 3, 1] : vector<1x4x16x16xf32> -> vector<1x16x16x4xf32>
    %c0_3 = arith.constant 0 : index
    %c0_4 = arith.constant 0 : index
    %c0_5 = arith.constant 0 : index
    %c0_6 = arith.constant 0 : index
    %2 = vector.load %arg4[%c0_3, %c0_4, %c0_5, %c0_6] : memref<1x16x16x4xf32, #tpu.memory_space<vmem>>, vector<1x16x16x4xf32>
    tpu.vector_store %arg4[%c0_3, %c0_4, %c0_5, %c0_6], %1 {strides = array<i32>} : memref<1x16x16x4xf32, #tpu.memory_space<vmem>>, vector<1x16x16x4xf32>,
    return
  }
  func.func @transform_0(%arg0: i32, %arg1: i32, %arg2: i32) -> (i32, i32, i32, i32) {
    %c0_i32 = arith.constant 0 : i32
    %c0_i32_0 = arith.constant 0 : i32
    return %arg0, %c0_i32, %arg1, %arg2 : i32, i32, i32, i32
  }
  func.func @transform_1(%arg0: i32, %arg1: i32, %arg2: i32) -> (i32, i32, i32, i32) {
    %c0_i32 = arith.constant 0 : i32
    %c0_i32_0 = arith.constant 0 : i32
    return %arg0, %arg1, %arg2, %c0_i32 : i32, i32, i32, i32
  }
}

</mosaic_0001>

<llo_original>
// kernel: tpu_custom_call.1
$region0: #{tpu_custom_call.1}
  #allocation0 [shape = 'u32[]', space=smem, size = 0x4, offset = 0x4, fixed_abs, tag = 'smem constant byte address 0x4 - core index']
  #allocation1 [shape = 'u32[72,128]{1,0:T(1,128)}', space=vmem, size = 0x9000, scoped, tag = 'internal scratch']
  %s0 = inlined_call_operand.hbm [shape: f32[2,4,16,16], index: 0, kind: input, shape index: {}]
  %s1 = inlined_call_operand.vmem [shape: f32[2,16,16,4], index: 1, kind: output, shape index: {}]
  %s2 = sld [smem:[#allocation0]]
  $region41: #{tpu_custom_call.1} parent=0
    _
  %s4 = ssub.s32 1, %s2
  %s5 = scalar_select 0, %s4, %s2
  $region1: #{tpu_custom_call.1} parent=0
    #allocation2 [shape = 'u8[65536]{0}', space=vmem, size = 0x10000, scoped, tag = 'input window, operand 0']
    #allocation3 [shape = 's32[2]{0}', space=sflag, size = 0x8, scoped, tag = 'scoped memory for tpu_custom_call.1']
    %6 = vsyncpa [#allocation3], 0
    %s7 = scalar_lea.sflag [#allocation3], 1
    %8 = vsyncpa %s7, 0
    loop: start=0, step=1, limit=4
    $region2: #{tpu_custom_call.1} parent=1 // loop_pre_header
      _
    $region3: #{tpu_custom_call.1} parent=1 // loop_header
      %s10 = sphi 0, %s14
      %p11 = scmp.ge.s32.totalorder %s10, 4
      %s17 = sphi 0, %s36
      %s18 = sphi 0, %s32
      %s19 = sphi 0, %s28
      %s20 = sphi 0, %s17
      %s21 = sphi 0, %s18
      %s22 = sphi 0, %s19
      %s23 = sphi 0, %s20
      %s24 = sphi 0, %s21
      %s25 = sphi 0, %s22
      %s43 = sphi 0, %s45
      %s46 = sphi 0, %s43
      %s47 = sphi 0, %s46
      %s63 = sphi 0, %s47
      %s73 = sphi 0, %s75
      %s76 = sphi 0, %s73
      %s77 = sphi 0, %s76
      %s93 = sphi 0, %s77
    $region4: #{tpu_custom_call.1} parent=1 // loop_header_branch
      %13 = sbr.rel (%p11) target = $region8
    $region5: #{tpu_custom_call.1} parent=1 // loop_body
      %s15 = ssub.s32 %s10, 1
      %s16 = ssub.s32 %s10, 2
      %s26 = sadd.s32 1, %s19
      %p27 = scmp.ge.s32.totalorder %s26, 1
      %s28 = scalar_select %p27, 0, %s26
      %s29 = sadd.s32 1, %s18
      %s30 = scalar_select %p27, %s29, %s18
      %p31 = scmp.ge.s32.totalorder %s30, 1
      %s32 = scalar_select %p31, 0, %s30
      %s33 = sadd.s32 1, %s17
      %s34 = scalar_select %p31, %s33, %s17
      %p35 = scmp.ge.s32.totalorder %s34, 2
      %s36 = scalar_select %p35, 0, %s34
      %s37 = ssub.s32 %s17, %s36
      %s38 = ssub.s32 %s18, %s32
      %s39 = sor.u32 %s37, %s38
      %s40 = ssub.s32 %s19, %s28
      %s41 = sor.u32 %s39, %s40
      %p42 = scmp.eq.s32.totalorder %s41, 0
      %s44 = sadd.s32 %s43, 1
      %s45 = scalar_select %p42, %s43, %s44
      %p48 = pneg %p42
      %p49 = scmp.eq.s32.totalorder %s10, 1
      %p50 = por %p48, %p49
      %p51 = scmp.ne.s32.totalorder %s43, %s46
      %p52 = scmp.eq.s32.totalorder %s10, 0
      %p53 = por %p51, %p52
      %p54 = scmp.ne.s32.totalorder %s43, %s46
      %p55 = scmp.eq.s32.totalorder %s15, 1
      %p56 = por %p54, %p55
      %p57 = scmp.ne.s32.totalorder %s46, %s47
      %p58 = scmp.eq.s32.totalorder %s15, 0
      %p59 = por %p57, %p58
      %p60 = scmp.ne.s32.totalorder %s46, %s47
      %p61 = scmp.eq.s32.totalorder %s16, 1
      %p62 = por %p60, %p61
      %p64 = scmp.ne.s32.totalorder %s47, %s63
      %p65 = scmp.eq.s32.totalorder %s16, 0
      %p66 = por %p64, %p65
      %s67 = ssub.s32 %s17, %s36
      %s68 = ssub.s32 %s18, %s32
      %s69 = sor.u32 %s67, %s68
      %s70 = ssub.s32 %s19, %s28
      %s71 = sor.u32 %s69, %s70
      %p72 = scmp.eq.s32.totalorder %s71, 0
      %s74 = sadd.s32 %s73, 1
      %s75 = scalar_select %p72, %s73, %s74
      %p78 = pneg %p72
      %p79 = scmp.eq.s32.totalorder %s10, 1
      %p80 = por %p78, %p79
      %p81 = scmp.ne.s32.totalorder %s73, %s76
      %p82 = scmp.eq.s32.totalorder %s10, 0
      %p83 = por %p81, %p82
      %p84 = scmp.ne.s32.totalorder %s73, %s76
      %p85 = scmp.eq.s32.totalorder %s15, 1
      %p86 = por %p84, %p85
      %p87 = scmp.ne.s32.totalorder %s76, %s77
      %p88 = scmp.eq.s32.totalorder %s15, 0
      %p89 = por %p87, %p88
      %p90 = scmp.ne.s32.totalorder %s76, %s77
      %p91 = scmp.eq.s32.totalorder %s16, 1
      %p92 = por %p90, %p91
      %p94 = scmp.ne.s32.totalorder %s77, %s93
      %p95 = scmp.eq.s32.totalorder %s16, 0
      %p96 = por %p94, %p95
      %p97 = scmp.le.s32.totalorder 1, %s10
      %p98 = scmp.lt.s32.totalorder %s10, 3
      %p99 = pnand %p97, %p98
      %p100 = pneg %p99
      // Predicated region
      $region9: #{tpu_custom_call.1} parent=5 // pred_check
        _
      $region10: #{tpu_custom_call.1} parent=5 // pred_check_branch
        %102 = sbr.rel (%p99) target = $region12
      $region11: #{tpu_custom_call.1} parent=5 // pred_region
        %s103 = ssub.s32 %s10, 1
      $region12: #{tpu_custom_call.1} parent=5 // pred_fallthru
        _
      %p104 = scmp.lt.s32.totalorder %s10, 2
      // Predicated region
      $region13: #{tpu_custom_call.1} parent=5 // pred_check
        %p105 = pneg %p104
      $region14: #{tpu_custom_call.1} parent=5 // pred_check_branch
        %107 = sbr.rel (%p105) target = $region16
      $region15: #{tpu_custom_call.1} parent=5 // pred_region
        // Predicated region
        $region17: #{tpu_custom_call.1} parent=15 // pred_check
          %p108 = pneg %p53
        $region18: #{tpu_custom_call.1} parent=15 // pred_check_branch
          %110 = sbr.rel (%p108) target = $region20
        $region19: #{tpu_custom_call.1} parent=15 // pred_region
          %s111 = sand.u32 %s43, 1
          %s112 = scalar_lea.sflag [#allocation3], %s111
          %s113 = sand.u32 %s43, 1
          %s114 = smul.addr %s113, 64
          %s115 = scalar_lea.vmem [#allocation2], %s114
          %s116 = smul.u32 2, %s18
          %118 = vsyncadd %s112, 0
          %s119 = sadd.s32 %s19, %s116
          %s120 = smul.addr %s17, 8
          %s121 = sadd.s32 %s119, %s120
          %s122 = smul.addr %s121, 8
          %s123 = scalar_lea.hbm %s0, %s122
          %s124 = sshll.u32 %s123, 4
          %s125 = int_to_ptr.hbm [resolvable:$true] %s124
          %s126 = sshll.u32 %s115, 4
          %s127 = int_to_ptr.vmem [resolvable:$true] %s126
          %132 = dma.hbm_to_vmem [thread:$0]  %s125, 1024, %s127, %s112, 128, 128, 8
        $region20: #{tpu_custom_call.1} parent=15 // pred_fallthru
          _
      $region16: #{tpu_custom_call.1} parent=5 // pred_fallthru
        _
      %p133 = scmp.le.s32.totalorder 1, %s10
      %p134 = scmp.lt.s32.totalorder %s10, 3
      %p135 = pnand %p133, %p134
      %p136 = pneg %p135
      // Predicated region
      $region21: #{tpu_custom_call.1} parent=5 // pred_check
        _
      $region22: #{tpu_custom_call.1} parent=5 // pred_check_branch
        %138 = sbr.rel (%p135) target = $region24
      $region23: #{tpu_custom_call.1} parent=5 // pred_region
        %s139 = ssub.s32 %s10, 1
        %s140 = sand.u32 %s46, 1
        %s141 = scalar_lea.sflag [#allocation3], %s140
        %s142 = sand.u32 %s46, 1
        %s143 = smul.addr %s142, 64
        %s144 = scalar_lea.vmem [#allocation2], %s143
        // Predicated region
        $region25: #{tpu_custom_call.1} parent=23 // pred_check
          %p145 = pneg %p59
        $region26: #{tpu_custom_call.1} parent=23 // pred_check_branch
          %147 = sbr.rel (%p145) target = $region28
        $region27: #{tpu_custom_call.1} parent=23 // pred_region
          %149 = dma.done %s141, 1024
        $region28: #{tpu_custom_call.1} parent=23 // pred_fallthru
          _
        %s150 = sand.u32 %s46, 1
        %s151 = scalar_lea.sflag [#allocation3], %s150
        %s152 = sand.u32 %s46, 1
        %s153 = smul.addr %s152, 64
        %s154 = scalar_lea.vmem [#allocation2], %s153
        %p155 = pneg %p59
        %p156 = pneg %p56
        %p157 = pneg %p89
        %p158 = pneg %p86
        %s159 = smul.u32 16, %s21
        %s160 = smul.u32 2, %s22
        %p161 = scmp.lt.s32.totalorder %s20, 1
        %s162 = scalar_select %p161, %s20, 1
        %p163 = scmp.lt.s32.totalorder %s159, 15
        %s164 = scalar_select %p163, %s159, 15
        %p165 = scmp.lt.s32.totalorder %s160, 1
        %s166 = scalar_select %p165, %s160, 1
        %s167 = smul.addr %s164, 2
        %s168 = sadd.s32 %s166, %s167
        %s169 = smul.addr %s162, 32
        %s170 = sadd.s32 %s168, %s169
        %s171 = smul.addr %s170, 8
        %s172 = scalar_lea.vmem %s1, %s171
        %s173 = smul.u32 2, %s21
        %s174 = smul.u32 16, %s21
        %s175 = smul.u32 2, %s22
        %p176 = scmp.lt.s32.totalorder %s20, 1
        %s177 = scalar_select %p176, %s20, 1
        %p178 = scmp.lt.s32.totalorder %s174, 15
        %s179 = scalar_select %p178, %s174, 15
        %p180 = scmp.lt.s32.totalorder %s175, 1
        %s181 = scalar_select %p180, %s175, 1
        %s182 = smul.addr %s179, 2
        %s183 = sadd.s32 %s181, %s182
        %s184 = smul.addr %s177, 32
        %s185 = sadd.s32 %s183, %s184
        %s186 = smul.addr %s185, 8
        %s187 = scalar_lea.vmem %s1, %s186
        %s188 = smul.u32 16, %s21
        %s189 = smul.u32 2, %s22
        %v190 = vld [vmem:[%s144] sm:$0xff]
        %v191 = vld [vmem:[%s144 + $0x8] sm:$0xff]
        %v192 = vld [vmem:[%s144 + $0x10] sm:$0xff]
        %v193 = vld [vmem:[%s144 + $0x18] sm:$0xff]
        %v194 = vld [vmem:[%s144 + $0x20] sm:$0xff]
        %v195 = vld [vmem:[%s144 + $0x28] sm:$0xff]
        %v196 = vld [vmem:[%s144 + $0x30] sm:$0xff]
        %v197 = vld [vmem:[%s144 + $0x38] sm:$0xff]
        %198 = vxpose.xlu0.b32.start [1/16] %v190, 128
        %199 = vxpose.xlu0.b32.cont [2/16] %v191, 128
        %200 = vxpose.xlu0.b32.cont [3/16] 0.0, 128
        %201 = vxpose.xlu0.b32.cont [4/16] 0.0, 128
        %202 = vxpose.xlu0.b32.cont [5/16] 0.0, 128
        %203 = vxpose.xlu0.b32.cont [6/16] 0.0, 128
        %204 = vxpose.xlu0.b32.cont [7/16] 0.0, 128
        %205 = vxpose.xlu0.b32.cont [8/16] 0.0, 128
        %206 = vxpose.xlu0.b32.cont [9/16] 0.0, 128
        %207 = vxpose.xlu0.b32.cont [10/16] 0.0, 128
        %208 = vxpose.xlu0.b32.cont [11/16] 0.0, 128
        %209 = vxpose.xlu0.b32.cont [12/16] 0.0, 128
        %210 = vxpose.xlu0.b32.cont [13/16] 0.0, 128
        %211 = vxpose.xlu0.b32.cont [14/16] 0.0, 128
        %212 = vxpose.xlu0.b32.cont [15/16] 0.0, 128
        %213 = vxpose.xlu0.b32.end [16/16] 0.0, 128
        %v214 = vpop.trf.xlu0
        %v215 = vpop.trf.xlu0
        %v216 = vpop.trf.xlu0
        %v217 = vpop.trf.xlu0
        %v218 = vpop.trf.xlu0
        %v219 = vpop.trf.xlu0
        %v220 = vpop.trf.xlu0
        %v221 = vpop.trf.xlu0
        %v222 = vpop.trf.xlu0
        %v223 = vpop.trf.xlu0
        %v224 = vpop.trf.xlu0
        %v225 = vpop.trf.xlu0
        %v226 = vpop.trf.xlu0
        %v227 = vpop.trf.xlu0
        %v228 = vpop.trf.xlu0
        %v229 = vpop.trf.xlu0
        %230 = vxpose.xlu0.b32.start [1/16] %v192, 128
        %231 = vxpose.xlu0.b32.cont [2/16] %v193, 128
        %232 = vxpose.xlu0.b32.cont [3/16] 0.0, 128
        %233 = vxpose.xlu0.b32.cont [4/16] 0.0, 128
        %234 = vxpose.xlu0.b32.cont [5/16] 0.0, 128
        %235 = vxpose.xlu0.b32.cont [6/16] 0.0, 128
        %236 = vxpose.xlu0.b32.cont [7/16] 0.0, 128
        %237 = vxpose.xlu0.b32.cont [8/16] 0.0, 128
        %238 = vxpose.xlu0.b32.cont [9/16] 0.0, 128
        %239 = vxpose.xlu0.b32.cont [10/16] 0.0, 128
        %240 = vxpose.xlu0.b32.cont [11/16] 0.0, 128
        %241 = vxpose.xlu0.b32.cont [12/16] 0.0, 128
        %242 = vxpose.xlu0.b32.cont [13/16] 0.0, 128
        %243 = vxpose.xlu0.b32.cont [14/16] 0.0, 128
        %244 = vxpose.xlu0.b32.cont [15/16] 0.0, 128
        %245 = vxpose.xlu0.b32.end [16/16] 0.0, 128
        %v246 = vpop.trf.xlu0
        %v247 = vpop.trf.xlu0
        %v248 = vpop.trf.xlu0
        %v249 = vpop.trf.xlu0
        %v250 = vpop.trf.xlu0
        %v251 = vpop.trf.xlu0
        %v252 = vpop.trf.xlu0
        %v253 = vpop.trf.xlu0
        %v254 = vpop.trf.xlu0
        %v255 = vpop.trf.xlu0
        %v256 = vpop.trf.xlu0
        %v257 = vpop.trf.xlu0
        %v258 = vpop.trf.xlu0
        %v259 = vpop.trf.xlu0
        %v260 = vpop.trf.xlu0
        %v261 = vpop.trf.xlu0
        %262 = vxpose.xlu0.b32.start [1/16] %v194, 128
        %263 = vxpose.xlu0.b32.cont [2/16] %v195, 128
        %264 = vxpose.xlu0.b32.cont [3/16] 0.0, 128
        %265 = vxpose.xlu0.b32.cont [4/16] 0.0, 128
        %266 = vxpose.xlu0.b32.cont [5/16] 0.0, 128
        %267 = vxpose.xlu0.b32.cont [6/16] 0.0, 128
        %268 = vxpose.xlu0.b32.cont [7/16] 0.0, 128
        %269 = vxpose.xlu0.b32.cont [8/16] 0.0, 128
        %270 = vxpose.xlu0.b32.cont [9/16] 0.0, 128
        %271 = vxpose.xlu0.b32.cont [10/16] 0.0, 128
        %272 = vxpose.xlu0.b32.cont [11/16] 0.0, 128
        %273 = vxpose.xlu0.b32.cont [12/16] 0.0, 128
        %274 = vxpose.xlu0.b32.cont [13/16] 0.0, 128
        %275 = vxpose.xlu0.b32.cont [14/16] 0.0, 128
        %276 = vxpose.xlu0.b32.cont [15/16] 0.0, 128
        %277 = vxpose.xlu0.b32.end [16/16] 0.0, 128
        %v278 = vpop.trf.xlu0
        %v279 = vpop.trf.xlu0
        %v280 = vpop.trf.xlu0
        %v281 = vpop.trf.xlu0
        %v282 = vpop.trf.xlu0
        %v283 = vpop.trf.xlu0
        %v284 = vpop.trf.xlu0
        %v285 = vpop.trf.xlu0
        %v286 = vpop.trf.xlu0
        %v287 = vpop.trf.xlu0
        %v288 = vpop.trf.xlu0
        %v289 = vpop.trf.xlu0
        %v290 = vpop.trf.xlu0
        %v291 = vpop.trf.xlu0
        %v292 = vpop.trf.xlu0
        %v293 = vpop.trf.xlu0
        %294 = vxpose.xlu0.b32.start [1/16] %v196, 128
        %295 = vxpose.xlu0.b32.cont [2/16] %v197, 128
        %296 = vxpose.xlu0.b32.cont [3/16] 0.0, 128
        %297 = vxpose.xlu0.b32.cont [4/16] 0.0, 128
        %298 = vxpose.xlu0.b32.cont [5/16] 0.0, 128
        %299 = vxpose.xlu0.b32.cont [6/16] 0.0, 128
        %300 = vxpose.xlu0.b32.cont [7/16] 0.0, 128
        %301 = vxpose.xlu0.b32.cont [8/16] 0.0, 128
        %302 = vxpose.xlu0.b32.cont [9/16] 0.0, 128
        %303 = vxpose.xlu0.b32.cont [10/16] 0.0, 128
        %304 = vxpose.xlu0.b32.cont [11/16] 0.0, 128
        %305 = vxpose.xlu0.b32.cont [12/16] 0.0, 128
        %306 = vxpose.xlu0.b32.cont [13/16] 0.0, 128
        %307 = vxpose.xlu0.b32.cont [14/16] 0.0, 128
        %308 = vxpose.xlu0.b32.cont [15/16] 0.0, 128
        %309 = vxpose.xlu0.b32.end [16/16] 0.0, 128
        %v310 = vpop.trf.xlu0
        %v311 = vpop.trf.xlu0
        %v312 = vpop.trf.xlu0
        %v313 = vpop.trf.xlu0
        %v314 = vpop.trf.xlu0
        %v315 = vpop.trf.xlu0
        %v316 = vpop.trf.xlu0
        %v317 = vpop.trf.xlu0
        %v318 = vpop.trf.xlu0
        %v319 = vpop.trf.xlu0
        %v320 = vpop.trf.xlu0
        %v321 = vpop.trf.xlu0
        %v322 = vpop.trf.xlu0
        %v323 = vpop.trf.xlu0
        %v324 = vpop.trf.xlu0
        %v325 = vpop.trf.xlu0
        %v326 = vrot.slane %v278, 4
        %vm327 = vcmask 1047556
        %v328 = vsel %vm327, %v326, %v214
        %v329 = vrot.slane %v214, 4
        %v330 = vsel %vm327, %v278, %v329
        %v332 = vunpack.c.l.s4 1983009808
        %v333 = vunpack.c.0.s8 %v332
        %v334 = vperm.slane %v328, %v333
        %v336 = vunpack.c.l.s4 1983009808
        %v337 = vunpack.c.0.s8 %v336
        %v338 = vperm.slane %v330, %v337
        %v339 = vrot.slane %v310, 4
        %v340 = vsel %vm327, %v339, %v246
        %v341 = vrot.slane %v246, 4
        %v342 = vsel %vm327, %v310, %v341
        %v344 = vunpack.c.l.s4 1983009808
        %v345 = vunpack.c.0.s8 %v344
        %v346 = vperm.slane %v340, %v345
        %v348 = vunpack.c.l.s4 1983009808
        %v349 = vunpack.c.0.s8 %v348
        %v350 = vperm.slane %v342, %v349
        %v351 = vrot.slane %v346, 4
        %v352 = vsel %vm327, %v351, %v334
        %v353 = vrot.slane %v334, 4
        %v354 = vsel %vm327, %v346, %v353
        %v356 = vunpack.c.l.s4 1934713408
        %v357 = vunpack.c.0.s8 %v356
        %v358 = vperm.slane %v352, %v357
        %v360 = vunpack.c.l.s4 1934713408
        %v361 = vunpack.c.0.s8 %v360
        %v362 = vperm.slane %v354, %v361
        %v363 = vrot.slane %v350, 4
        %v364 = vsel %vm327, %v363, %v338
        %v365 = vrot.slane %v338, 4
        %v366 = vsel %vm327, %v350, %v365
        %v368 = vunpack.c.l.s4 1934713408
        %v369 = vunpack.c.0.s8 %v368
        %v370 = vperm.slane %v364, %v369
        %v372 = vunpack.c.l.s4 1934713408
        %v373 = vunpack.c.0.s8 %v372
        %v374 = vperm.slane %v366, %v373
        %v375 = vrot.slane %v358, 4
        %v376 = vsel %vm327, 0.0, %v375
        %v377 = vrot.slane %v362, 4
        %v378 = vsel %vm327, 0.0, %v377
        %v379 = vrot.slane %v370, 4
        %v380 = vsel %vm327, 0.0, %v379
        %v381 = vrot.slane %v374, 4
        %v382 = vsel %vm327, 0.0, %v381
        %v383 = vrot.slane %v279, 4
        %v384 = vsel %vm327, %v383, %v215
        %v385 = vrot.slane %v215, 4
        %v386 = vsel %vm327, %v279, %v385
        %v388 = vunpack.c.l.s4 1983009808
        %v389 = vunpack.c.0.s8 %v388
        %v390 = vperm.slane %v384, %v389
        %v392 = vunpack.c.l.s4 1983009808
        %v393 = vunpack.c.0.s8 %v392
        %v394 = vperm.slane %v386, %v393
        %v395 = vrot.slane %v311, 4
        %v396 = vsel %vm327, %v395, %v247
        %v397 = vrot.slane %v247, 4
        %v398 = vsel %vm327, %v311, %v397
        %v400 = vunpack.c.l.s4 1983009808
        %v401 = vunpack.c.0.s8 %v400
        %v402 = vperm.slane %v396, %v401
        %v404 = vunpack.c.l.s4 1983009808
        %v405 = vunpack.c.0.s8 %v404
        %v406 = vperm.slane %v398, %v405
        %v407 = vrot.slane %v402, 4
        %v408 = vsel %vm327, %v407, %v390
        %v409 = vrot.slane %v390, 4
        %v410 = vsel %vm327, %v402, %v409
        %v412 = vunpack.c.l.s4 1934713408
        %v413 = vunpack.c.0.s8 %v412
        %v414 = vperm.slane %v408, %v413
        %v416 = vunpack.c.l.s4 1934713408
        %v417 = vunpack.c.0.s8 %v416
        %v418 = vperm.slane %v410, %v417
        %v419 = vrot.slane %v406, 4
        %v420 = vsel %vm327, %v419, %v394
        %v421 = vrot.slane %v394, 4
        %v422 = vsel %vm327, %v406, %v421
        %v424 = vunpack.c.l.s4 1934713408
        %v425 = vunpack.c.0.s8 %v424
        %v426 = vperm.slane %v420, %v425
        %v428 = vunpack.c.l.s4 1934713408
        %v429 = vunpack.c.0.s8 %v428
        %v430 = vperm.slane %v422, %v429
        %v431 = vrot.slane %v414, 4
        %v432 = vsel %vm327, 0.0, %v431
        %v433 = vrot.slane %v418, 4
        %v434 = vsel %vm327, 0.0, %v433
        %v435 = vrot.slane %v426, 4
        %v436 = vsel %vm327, 0.0, %v435
        %v437 = vrot.slane %v430, 4
        %v438 = vsel %vm327, 0.0, %v437
        %439 = vxpose.xlu0.b32.start [1/16] %v358, 128
        %440 = vxpose.xlu0.b32.cont [2/16] 0.0, 128
        %441 = vxpose.xlu0.b32.cont [3/16] 0.0, 128
        %442 = vxpose.xlu0.b32.cont [4/16] 0.0, 128
        %443 = vxpose.xlu0.b32.cont [5/16] 0.0, 128
        %444 = vxpose.xlu0.b32.cont [6/16] 0.0, 128
        %445 = vxpose.xlu0.b32.cont [7/16] 0.0, 128
        %446 = vxpose.xlu0.b32.cont [8/16] 0.0, 128
        %447 = vxpose.xlu0.b32.cont [9/16] 0.0, 128
        %448 = vxpose.xlu0.b32.cont [10/16] 0.0, 128
        %449 = vxpose.xlu0.b32.cont [11/16] 0.0, 128
        %450 = vxpose.xlu0.b32.cont [12/16] 0.0, 128
        %451 = vxpose.xlu0.b32.cont [13/16] 0.0, 128
        %452 = vxpose.xlu0.b32.cont [14/16] 0.0, 128
        %453 = vxpose.xlu0.b32.cont [15/16] 0.0, 128
        %454 = vxpose.xlu0.b32.end [16/16] 0.0, 128
        %v455 = vpop.trf.xlu0
        %v456 = vpop.trf.xlu0
        %v457 = vpop.trf.xlu0
        %v458 = vpop.trf.xlu0
        %v459 = vpop.trf.xlu0
        %v460 = vpop.trf.xlu0
        %v461 = vpop.trf.xlu0
        %v462 = vpop.trf.xlu0
        %v463 = vpop.trf.xlu0
        %v464 = vpop.trf.xlu0
        %v465 = vpop.trf.xlu0
        %v466 = vpop.trf.xlu0
        %v467 = vpop.trf.xlu0
        %v468 = vpop.trf.xlu0
        %v469 = vpop.trf.xlu0
        %v470 = vpop.trf.xlu0
        %471 = vxpose.xlu0.b32.start [1/16] %v376, 128
        %472 = vxpose.xlu0.b32.cont [2/16] 0.0, 128
        %473 = vxpose.xlu0.b32.cont [3/16] 0.0, 128
        %474 = vxpose.xlu0.b32.cont [4/16] 0.0, 128
        %475 = vxpose.xlu0.b32.cont [5/16] 0.0, 128
        %476 = vxpose.xlu0.b32.cont [6/16] 0.0, 128
        %477 = vxpose.xlu0.b32.cont [7/16] 0.0, 128
        %478 = vxpose.xlu0.b32.cont [8/16] 0.0, 128
        %479 = vxpose.xlu0.b32.cont [9/16] 0.0, 128
        %480 = vxpose.xlu0.b32.cont [10/16] 0.0, 128
        %481 = vxpose.xlu0.b32.cont [11/16] 0.0, 128
        %482 = vxpose.xlu0.b32.cont [12/16] 0.0, 128
        %483 = vxpose.xlu0.b32.cont [13/16] 0.0, 128
        %484 = vxpose.xlu0.b32.cont [14/16] 0.0, 128
        %485 = vxpose.xlu0.b32.cont [15/16] 0.0, 128
        %486 = vxpose.xlu0.b32.end [16/16] 0.0, 128
        %v487 = vpop.trf.xlu0
        %v488 = vpop.trf.xlu0
        %v489 = vpop.trf.xlu0
        %v490 = vpop.trf.xlu0
        %v491 = vpop.trf.xlu0
        %v492 = vpop.trf.xlu0
        %v493 = vpop.trf.xlu0
        %v494 = vpop.trf.xlu0
        %v495 = vpop.trf.xlu0
        %v496 = vpop.trf.xlu0
        %v497 = vpop.trf.xlu0
        %v498 = vpop.trf.xlu0
        %v499 = vpop.trf.xlu0
        %v500 = vpop.trf.xlu0
        %v501 = vpop.trf.xlu0
        %v502 = vpop.trf.xlu0
        %503 = vxpose.xlu0.b32.start [1/16] %v362, 128
        %504 = vxpose.xlu0.b32.cont [2/16] 0.0, 128
        %505 = vxpose.xlu0.b32.cont [3/16] 0.0, 128
        %506 = vxpose.xlu0.b32.cont [4/16] 0.0, 128
        %507 = vxpose.xlu0.b32.cont [5/16] 0.0, 128
        %508 = vxpose.xlu0.b32.cont [6/16] 0.0, 128
        %509 = vxpose.xlu0.b32.cont [7/16] 0.0, 128
        %510 = vxpose.xlu0.b32.cont [8/16] 0.0, 128
        %511 = vxpose.xlu0.b32.cont [9/16] 0.0, 128
        %512 = vxpose.xlu0.b32.cont [10/16] 0.0, 128
        %513 = vxpose.xlu0.b32.cont [11/16] 0.0, 128
        %514 = vxpose.xlu0.b32.cont [12/16] 0.0, 128
        %515 = vxpose.xlu0.b32.cont [13/16] 0.0, 128
        %516 = vxpose.xlu0.b32.cont [14/16] 0.0, 128
        %517 = vxpose.xlu0.b32.cont [15/16] 0.0, 128
        %518 = vxpose.xlu0.b32.end [16/16] 0.0, 128
        %v519 = vpop.trf.xlu0
        %v520 = vpop.trf.xlu0
        %v521 = vpop.trf.xlu0
        %v522 = vpop.trf.xlu0
        %v523 = vpop.trf.xlu0
        %v524 = vpop.trf.xlu0
        %v525 = vpop.trf.xlu0
        %v526 = vpop.trf.xlu0
        %v527 = vpop.trf.xlu0
        %v528 = vpop.trf.xlu0
        %v529 = vpop.trf.xlu0
        %v530 = vpop.trf.xlu0
        %v531 = vpop.trf.xlu0
        %v532 = vpop.trf.xlu0
        %v533 = vpop.trf.xlu0
        %v534 = vpop.trf.xlu0
        %535 = vxpose.xlu0.b32.start [1/16] %v378, 128
        %536 = vxpose.xlu0.b32.cont [2/16] 0.0, 128
        %537 = vxpose.xlu0.b32.cont [3/16] 0.0, 128
        %538 = vxpose.xlu0.b32.cont [4/16] 0.0, 128
        %539 = vxpose.xlu0.b32.cont [5/16] 0.0, 128
        %540 = vxpose.xlu0.b32.cont [6/16] 0.0, 128
        %541 = vxpose.xlu0.b32.cont [7/16] 0.0, 128
        %542 = vxpose.xlu0.b32.cont [8/16] 0.0, 128
        %543 = vxpose.xlu0.b32.cont [9/16] 0.0, 128
        %544 = vxpose.xlu0.b32.cont [10/16] 0.0, 128
        %545 = vxpose.xlu0.b32.cont [11/16] 0.0, 128
        %546 = vxpose.xlu0.b32.cont [12/16] 0.0, 128
        %547 = vxpose.xlu0.b32.cont [13/16] 0.0, 128
        %548 = vxpose.xlu0.b32.cont [14/16] 0.0, 128
        %549 = vxpose.xlu0.b32.cont [15/16] 0.0, 128
        %550 = vxpose.xlu0.b32.end [16/16] 0.0, 128
        %v551 = vpop.trf.xlu0
        %v552 = vpop.trf.xlu0
        %v553 = vpop.trf.xlu0
        %v554 = vpop.trf.xlu0
        %v555 = vpop.trf.xlu0
        %v556 = vpop.trf.xlu0
        %v557 = vpop.trf.xlu0
        %v558 = vpop.trf.xlu0
        %v559 = vpop.trf.xlu0
        %v560 = vpop.trf.xlu0
        %v561 = vpop.trf.xlu0
        %v562 = vpop.trf.xlu0
        %v563 = vpop.trf.xlu0
        %v564 = vpop.trf.xlu0
        %v565 = vpop.trf.xlu0
        %v566 = vpop.trf.xlu0
        %567 = vxpose.xlu0.b32.start [1/16] %v370, 128
        %568 = vxpose.xlu0.b32.cont [2/16] 0.0, 128
        %569 = vxpose.xlu0.b32.cont [3/16] 0.0, 128
        %570 = vxpose.xlu0.b32.cont [4/16] 0.0, 128
        %571 = vxpose.xlu0.b32.cont [5/16] 0.0, 128
        %572 = vxpose.xlu0.b32.cont [6/16] 0.0, 128
        %573 = vxpose.xlu0.b32.cont [7/16] 0.0, 128
        %574 = vxpose.xlu0.b32.cont [8/16] 0.0, 128
        %575 = vxpose.xlu0.b32.cont [9/16] 0.0, 128
        %576 = vxpose.xlu0.b32.cont [10/16] 0.0, 128
        %577 = vxpose.xlu0.b32.cont [11/16] 0.0, 128
        %578 = vxpose.xlu0.b32.cont [12/16] 0.0, 128
        %579 = vxpose.xlu0.b32.cont [13/16] 0.0, 128
        %580 = vxpose.xlu0.b32.cont [14/16] 0.0, 128
        %581 = vxpose.xlu0.b32.cont [15/16] 0.0, 128
        %582 = vxpose.xlu0.b32.end [16/16] 0.0, 128
        %v583 = vpop.trf.xlu0
        %v584 = vpop.trf.xlu0
        %v585 = vpop.trf.xlu0
        %v586 = vpop.trf.xlu0
        %v587 = vpop.trf.xlu0
        %v588 = vpop.trf.xlu0
        %v589 = vpop.trf.xlu0
        %v590 = vpop.trf.xlu0
        %v591 = vpop.trf.xlu0
        %v592 = vpop.trf.xlu0
        %v593 = vpop.trf.xlu0
        %v594 = vpop.trf.xlu0
        %v595 = vpop.trf.xlu0
        %v596 = vpop.trf.xlu0
        %v597 = vpop.trf.xlu0
        %v598 = vpop.trf.xlu0
        %599 = vxpose.xlu0.b32.start [1/16] %v380, 128
        %600 = vxpose.xlu0.b32.cont [2/16] 0.0, 128
        %601 = vxpose.xlu0.b32.cont [3/16] 0.0, 128
        %602 = vxpose.xlu0.b32.cont [4/16] 0.0, 128
        %603 = vxpose.xlu0.b32.cont [5/16] 0.0, 128
        %604 = vxpose.xlu0.b32.cont [6/16] 0.0, 128
        %605 = vxpose.xlu0.b32.cont [7/16] 0.0, 128
        %606 = vxpose.xlu0.b32.cont [8/16] 0.0, 128
        %607 = vxpose.xlu0.b32.cont [9/16] 0.0, 128
        %608 = vxpose.xlu0.b32.cont [10/16] 0.0, 128
        %609 = vxpose.xlu0.b32.cont [11/16] 0.0, 128
        %610 = vxpose.xlu0.b32.cont [12/16] 0.0, 128
        %611 = vxpose.xlu0.b32.cont [13/16] 0.0, 128
        %612 = vxpose.xlu0.b32.cont [14/16] 0.0, 128
        %613 = vxpose.xlu0.b32.cont [15/16] 0.0, 128
        %614 = vxpose.xlu0.b32.end [16/16] 0.0, 128
        %v615 = vpop.trf.xlu0
        %v616 = vpop.trf.xlu0
        %v617 = vpop.trf.xlu0
        %v618 = vpop.trf.xlu0
        %v619 = vpop.trf.xlu0
        %v620 = vpop.trf.xlu0
        %v621 = vpop.trf.xlu0
        %v622 = vpop.trf.xlu0
        %v623 = vpop.trf.xlu0
        %v624 = vpop.trf.xlu0
        %v625 = vpop.trf.xlu0
        %v626 = vpop.trf.xlu0
        %v627 = vpop.trf.xlu0
        %v628 = vpop.trf.xlu0
        %v629 = vpop.trf.xlu0
        %v630 = vpop.trf.xlu0
        %631 = vxpose.xlu0.b32.start [1/16] %v374, 128
        %632 = vxpose.xlu0.b32.cont [2/16] 0.0, 128
        %633 = vxpose.xlu0.b32.cont [3/16] 0.0, 128
        %634 = vxpose.xlu0.b32.cont [4/16] 0.0, 128
        %635 = vxpose.xlu0.b32.cont [5/16] 0.0, 128
        %636 = vxpose.xlu0.b32.cont [6/16] 0.0, 128
        %637 = vxpose.xlu0.b32.cont [7/16] 0.0, 128
        %638 = vxpose.xlu0.b32.cont [8/16] 0.0, 128
        %639 = vxpose.xlu0.b32.cont [9/16] 0.0, 128
        %640 = vxpose.xlu0.b32.cont [10/16] 0.0, 128
        %641 = vxpose.xlu0.b32.cont [11/16] 0.0, 128
        %642 = vxpose.xlu0.b32.cont [12/16] 0.0, 128
        %643 = vxpose.xlu0.b32.cont [13/16] 0.0, 128
        %644 = vxpose.xlu0.b32.cont [14/16] 0.0, 128
        %645 = vxpose.xlu0.b32.cont [15/16] 0.0, 128
        %646 = vxpose.xlu0.b32.end [16/16] 0.0, 128
        %v647 = vpop.trf.xlu0
        %v648 = vpop.trf.xlu0
        %v649 = vpop.trf.xlu0
        %v650 = vpop.trf.xlu0
        %v651 = vpop.trf.xlu0
        %v652 = vpop.trf.xlu0
        %v653 = vpop.trf.xlu0
        %v654 = vpop.trf.xlu0
        %v655 = vpop.trf.xlu0
        %v656 = vpop.trf.xlu0
        %v657 = vpop.trf.xlu0
        %v658 = vpop.trf.xlu0
        %v659 = vpop.trf.xlu0
        %v660 = vpop.trf.xlu0
        %v661 = vpop.trf.xlu0
        %v662 = vpop.trf.xlu0
        %663 = vxpose.xlu0.b32.start [1/16] %v382, 128
        %664 = vxpose.xlu0.b32.cont [2/16] 0.0, 128
        %665 = vxpose.xlu0.b32.cont [3/16] 0.0, 128
        %666 = vxpose.xlu0.b32.cont [4/16] 0.0, 128
        %667 = vxpose.xlu0.b32.cont [5/16] 0.0, 128
        %668 = vxpose.xlu0.b32.cont [6/16] 0.0, 128
        %669 = vxpose.xlu0.b32.cont [7/16] 0.0, 128
        %670 = vxpose.xlu0.b32.cont [8/16] 0.0, 128
        %671 = vxpose.xlu0.b32.cont [9/16] 0.0, 128
        %672 = vxpose.xlu0.b32.cont [10/16] 0.0, 128
        %673 = vxpose.xlu0.b32.cont [11/16] 0.0, 128
        %674 = vxpose.xlu0.b32.cont [12/16] 0.0, 128
        %675 = vxpose.xlu0.b32.cont [13/16] 0.0, 128
        %676 = vxpose.xlu0.b32.cont [14/16] 0.0, 128
        %677 = vxpose.xlu0.b32.cont [15/16] 0.0, 128
        %678 = vxpose.xlu0.b32.end [16/16] 0.0, 128
        %v679 = vpop.trf.xlu0
        %v680 = vpop.trf.xlu0
        %v681 = vpop.trf.xlu0
        %v682 = vpop.trf.xlu0
        %v683 = vpop.trf.xlu0
        %v684 = vpop.trf.xlu0
        %v685 = vpop.trf.xlu0
        %v686 = vpop.trf.xlu0
        %v687 = vpop.trf.xlu0
        %v688 = vpop.trf.xlu0
        %v689 = vpop.trf.xlu0
        %v690 = vpop.trf.xlu0
        %v691 = vpop.trf.xlu0
        %v692 = vpop.trf.xlu0
        %v693 = vpop.trf.xlu0
        %v694 = vpop.trf.xlu0
        %695 = vxpose.xlu0.b32.start [1/16] %v414, 128
        %696 = vxpose.xlu0.b32.cont [2/16] 0.0, 128
        %697 = vxpose.xlu0.b32.cont [3/16] 0.0, 128
        %698 = vxpose.xlu0.b32.cont [4/16] 0.0, 128
        %699 = vxpose.xlu0.b32.cont [5/16] 0.0, 128
        %700 = vxpose.xlu0.b32.cont [6/16] 0.0, 128
        %701 = vxpose.xlu0.b32.cont [7/16] 0.0, 128
        %702 = vxpose.xlu0.b32.cont [8/16] 0.0, 128
        %703 = vxpose.xlu0.b32.cont [9/16] 0.0, 128
        %704 = vxpose.xlu0.b32.cont [10/16] 0.0, 128
        %705 = vxpose.xlu0.b32.cont [11/16] 0.0, 128
        %706 = vxpose.xlu0.b32.cont [12/16] 0.0, 128
        %707 = vxpose.xlu0.b32.cont [13/16] 0.0, 128
        %708 = vxpose.xlu0.b32.cont [14/16] 0.0, 128
        %709 = vxpose.xlu0.b32.cont [15/16] 0.0, 128
        %710 = vxpose.xlu0.b32.end [16/16] 0.0, 128
        %v711 = vpop.trf.xlu0
        %v712 = vpop.trf.xlu0
        %v713 = vpop.trf.xlu0
        %v714 = vpop.trf.xlu0
        %v715 = vpop.trf.xlu0
        %v716 = vpop.trf.xlu0
        %v717 = vpop.trf.xlu0
        %v718 = vpop.trf.xlu0
        %v719 = vpop.trf.xlu0
        %v720 = vpop.trf.xlu0
        %v721 = vpop.trf.xlu0
        %v722 = vpop.trf.xlu0
        %v723 = vpop.trf.xlu0
        %v724 = vpop.trf.xlu0
        %v725 = vpop.trf.xlu0
        %v726 = vpop.trf.xlu0
        %727 = vxpose.xlu0.b32.start [1/16] %v432, 128
        %728 = vxpose.xlu0.b32.cont [2/16] 0.0, 128
        %729 = vxpose.xlu0.b32.cont [3/16] 0.0, 128
        %730 = vxpose.xlu0.b32.cont [4/16] 0.0, 128
        %731 = vxpose.xlu0.b32.cont [5/16] 0.0, 128
        %732 = vxpose.xlu0.b32.cont [6/16] 0.0, 128
        %733 = vxpose.xlu0.b32.cont [7/16] 0.0, 128
        %734 = vxpose.xlu0.b32.cont [8/16] 0.0, 128
        %735 = vxpose.xlu0.b32.cont [9/16] 0.0, 128
        %736 = vxpose.xlu0.b32.cont [10/16] 0.0, 128
        %737 = vxpose.xlu0.b32.cont [11/16] 0.0, 128
        %738 = vxpose.xlu0.b32.cont [12/16] 0.0, 128
        %739 = vxpose.xlu0.b32.cont [13/16] 0.0, 128
        %740 = vxpose.xlu0.b32.cont [14/16] 0.0, 128
        %741 = vxpose.xlu0.b32.cont [15/16] 0.0, 128
        %742 = vxpose.xlu0.b32.end [16/16] 0.0, 128
        %v743 = vpop.trf.xlu0
        %v744 = vpop.trf.xlu0
        %v745 = vpop.trf.xlu0
        %v746 = vpop.trf.xlu0
        %v747 = vpop.trf.xlu0
        %v748 = vpop.trf.xlu0
        %v749 = vpop.trf.xlu0
        %v750 = vpop.trf.xlu0
        %v751 = vpop.trf.xlu0
        %v752 = vpop.trf.xlu0
        %v753 = vpop.trf.xlu0
        %v754 = vpop.trf.xlu0
        %v755 = vpop.trf.xlu0
        %v756 = vpop.trf.xlu0
        %v757 = vpop.trf.xlu0
        %v758 = vpop.trf.xlu0
        %759 = vxpose.xlu0.b32.start [1/16] %v418, 128
        %760 = vxpose.xlu0.b32.cont [2/16] 0.0, 128
        %761 = vxpose.xlu0.b32.cont [3/16] 0.0, 128
        %762 = vxpose.xlu0.b32.cont [4/16] 0.0, 128
        %763 = vxpose.xlu0.b32.cont [5/16] 0.0, 128
        %764 = vxpose.xlu0.b32.cont [6/16] 0.0, 128
        %765 = vxpose.xlu0.b32.cont [7/16] 0.0, 128
        %766 = vxpose.xlu0.b32.cont [8/16] 0.0, 128
        %767 = vxpose.xlu0.b32.cont [9/16] 0.0, 128
        %768 = vxpose.xlu0.b32.cont [10/16] 0.0, 128
        %769 = vxpose.xlu0.b32.cont [11/16] 0.0, 128
        %770 = vxpose.xlu0.b32.cont [12/16] 0.0, 128
        %771 = vxpose.xlu0.b32.cont [13/16] 0.0, 128
        %772 = vxpose.xlu0.b32.cont [14/16] 0.0, 128
        %773 = vxpose.xlu0.b32.cont [15/16] 0.0, 128
        %774 = vxpose.xlu0.b32.end [16/16] 0.0, 128
        %v775 = vpop.trf.xlu0
        %v776 = vpop.trf.xlu0
        %v777 = vpop.trf.xlu0
        %v778 = vpop.trf.xlu0
        %v779 = vpop.trf.xlu0
        %v780 = vpop.trf.xlu0
        %v781 = vpop.trf.xlu0
        %v782 = vpop.trf.xlu0
        %v783 = vpop.trf.xlu0
        %v784 = vpop.trf.xlu0
        %v785 = vpop.trf.xlu0
        %v786 = vpop.trf.xlu0
        %v787 = vpop.trf.xlu0
        %v788 = vpop.trf.xlu0
        %v789 = vpop.trf.xlu0
        %v790 = vpop.trf.xlu0
        %791 = vxpose.xlu0.b32.start [1/16] %v434, 128
        %792 = vxpose.xlu0.b32.cont [2/16] 0.0, 128
        %793 = vxpose.xlu0.b32.cont [3/16] 0.0, 128
        %794 = vxpose.xlu0.b32.cont [4/16] 0.0, 128
        %795 = vxpose.xlu0.b32.cont [5/16] 0.0, 128
        %796 = vxpose.xlu0.b32.cont [6/16] 0.0, 128
        %797 = vxpose.xlu0.b32.cont [7/16] 0.0, 128
        %798 = vxpose.xlu0.b32.cont [8/16] 0.0, 128
        %799 = vxpose.xlu0.b32.cont [9/16] 0.0, 128
        %800 = vxpose.xlu0.b32.cont [10/16] 0.0, 128
        %801 = vxpose.xlu0.b32.cont [11/16] 0.0, 128
        %802 = vxpose.xlu0.b32.cont [12/16] 0.0, 128
        %803 = vxpose.xlu0.b32.cont [13/16] 0.0, 128
        %804 = vxpose.xlu0.b32.cont [14/16] 0.0, 128
        %805 = vxpose.xlu0.b32.cont [15/16] 0.0, 128
        %806 = vxpose.xlu0.b32.end [16/16] 0.0, 128
        %v807 = vpop.trf.xlu0
        %v808 = vpop.trf.xlu0
        %v809 = vpop.trf.xlu0
        %v810 = vpop.trf.xlu0
        %v811 = vpop.trf.xlu0
        %v812 = vpop.trf.xlu0
        %v813 = vpop.trf.xlu0
        %v814 = vpop.trf.xlu0
        %v815 = vpop.trf.xlu0
        %v816 = vpop.trf.xlu0
        %v817 = vpop.trf.xlu0
        %v818 = vpop.trf.xlu0
        %v819 = vpop.trf.xlu0
        %v820 = vpop.trf.xlu0
        %v821 = vpop.trf.xlu0
        %v822 = vpop.trf.xlu0
        %823 = vxpose.xlu0.b32.start [1/16] %v426, 128
        %824 = vxpose.xlu0.b32.cont [2/16] 0.0, 128
        %825 = vxpose.xlu0.b32.cont [3/16] 0.0, 128
        %826 = vxpose.xlu0.b32.cont [4/16] 0.0, 128
        %827 = vxpose.xlu0.b32.cont [5/16] 0.0, 128
        %828 = vxpose.xlu0.b32.cont [6/16] 0.0, 128
        %829 = vxpose.xlu0.b32.cont [7/16] 0.0, 128
        %830 = vxpose.xlu0.b32.cont [8/16] 0.0, 128
        %831 = vxpose.xlu0.b32.cont [9/16] 0.0, 128
        %832 = vxpose.xlu0.b32.cont [10/16] 0.0, 128
        %833 = vxpose.xlu0.b32.cont [11/16] 0.0, 128
        %834 = vxpose.xlu0.b32.cont [12/16] 0.0, 128
        %835 = vxpose.xlu0.b32.cont [13/16] 0.0, 128
        %836 = vxpose.xlu0.b32.cont [14/16] 0.0, 128
        %837 = vxpose.xlu0.b32.cont [15/16] 0.0, 128
        %838 = vxpose.xlu0.b32.end [16/16] 0.0, 128
        %v839 = vpop.trf.xlu0
        %v840 = vpop.trf.xlu0
        %v841 = vpop.trf.xlu0
        %v842 = vpop.trf.xlu0
        %v843 = vpop.trf.xlu0
        %v844 = vpop.trf.xlu0
        %v845 = vpop.trf.xlu0
        %v846 = vpop.trf.xlu0
        %v847 = vpop.trf.xlu0
        %v848 = vpop.trf.xlu0
        %v849 = vpop.trf.xlu0
        %v850 = vpop.trf.xlu0
        %v851 = vpop.trf.xlu0
        %v852 = vpop.trf.xlu0
        %v853 = vpop.trf.xlu0
        %v854 = vpop.trf.xlu0
        %855 = vxpose.xlu0.b32.start [1/16] %v436, 128
        %856 = vxpose.xlu0.b32.cont [2/16] 0.0, 128
        %857 = vxpose.xlu0.b32.cont [3/16] 0.0, 128
        %858 = vxpose.xlu0.b32.cont [4/16] 0.0, 128
        %859 = vxpose.xlu0.b32.cont [5/16] 0.0, 128
        %860 = vxpose.xlu0.b32.cont [6/16] 0.0, 128
        %861 = vxpose.xlu0.b32.cont [7/16] 0.0, 128
        %862 = vxpose.xlu0.b32.cont [8/16] 0.0, 128
        %863 = vxpose.xlu0.b32.cont [9/16] 0.0, 128
        %864 = vxpose.xlu0.b32.cont [10/16] 0.0, 128
        %865 = vxpose.xlu0.b32.cont [11/16] 0.0, 128
        %866 = vxpose.xlu0.b32.cont [12/16] 0.0, 128
        %867 = vxpose.xlu0.b32.cont [13/16] 0.0, 128
        %868 = vxpose.xlu0.b32.cont [14/16] 0.0, 128
        %869 = vxpose.xlu0.b32.cont [15/16] 0.0, 128
        %870 = vxpose.xlu0.b32.end [16/16] 0.0, 128
        %v871 = vpop.trf.xlu0
        %v872 = vpop.trf.xlu0
        %v873 = vpop.trf.xlu0
        %v874 = vpop.trf.xlu0
        %v875 = vpop.trf.xlu0
        %v876 = vpop.trf.xlu0
        %v877 = vpop.trf.xlu0
        %v878 = vpop.trf.xlu0
        %v879 = vpop.trf.xlu0
        %v880 = vpop.trf.xlu0
        %v881 = vpop.trf.xlu0
        %v882 = vpop.trf.xlu0
        %v883 = vpop.trf.xlu0
        %v884 = vpop.trf.xlu0
        %v885 = vpop.trf.xlu0
        %v886 = vpop.trf.xlu0
        %887 = vxpose.xlu0.b32.start [1/16] %v430, 128
        %888 = vxpose.xlu0.b32.cont [2/16] 0.0, 128
        %889 = vxpose.xlu0.b32.cont [3/16] 0.0, 128
        %890 = vxpose.xlu0.b32.cont [4/16] 0.0, 128
        %891 = vxpose.xlu0.b32.cont [5/16] 0.0, 128
        %892 = vxpose.xlu0.b32.cont [6/16] 0.0, 128
        %893 = vxpose.xlu0.b32.cont [7/16] 0.0, 128
        %894 = vxpose.xlu0.b32.cont [8/16] 0.0, 128
        %895 = vxpose.xlu0.b32.cont [9/16] 0.0, 128
        %896 = vxpose.xlu0.b32.cont [10/16] 0.0, 128
        %897 = vxpose.xlu0.b32.cont [11/16] 0.0, 128
        %898 = vxpose.xlu0.b32.cont [12/16] 0.0, 128
        %899 = vxpose.xlu0.b32.cont [13/16] 0.0, 128
        %900 = vxpose.xlu0.b32.cont [14/16] 0.0, 128
        %901 = vxpose.xlu0.b32.cont [15/16] 0.0, 128
        %902 = vxpose.xlu0.b32.end [16/16] 0.0, 128
        %v903 = vpop.trf.xlu0
        %v904 = vpop.trf.xlu0
        %v905 = vpop.trf.xlu0
        %v906 = vpop.trf.xlu0
        %v907 = vpop.trf.xlu0
        %v908 = vpop.trf.xlu0
        %v909 = vpop.trf.xlu0
        %v910 = vpop.trf.xlu0
        %v911 = vpop.trf.xlu0
        %v912 = vpop.trf.xlu0
        %v913 = vpop.trf.xlu0
        %v914 = vpop.trf.xlu0
        %v915 = vpop.trf.xlu0
        %v916 = vpop.trf.xlu0
        %v917 = vpop.trf.xlu0
        %v918 = vpop.trf.xlu0
        %919 = vxpose.xlu0.b32.start [1/16] %v438, 128
        %920 = vxpose.xlu0.b32.cont [2/16] 0.0, 128
        %921 = vxpose.xlu0.b32.cont [3/16] 0.0, 128
        %922 = vxpose.xlu0.b32.cont [4/16] 0.0, 128
        %923 = vxpose.xlu0.b32.cont [5/16] 0.0, 128
        %924 = vxpose.xlu0.b32.cont [6/16] 0.0, 128
        %925 = vxpose.xlu0.b32.cont [7/16] 0.0, 128
        %926 = vxpose.xlu0.b32.cont [8/16] 0.0, 128
        %927 = vxpose.xlu0.b32.cont [9/16] 0.0, 128
        %928 = vxpose.xlu0.b32.cont [10/16] 0.0, 128
        %929 = vxpose.xlu0.b32.cont [11/16] 0.0, 128
        %930 = vxpose.xlu0.b32.cont [12/16] 0.0, 128
        %931 = vxpose.xlu0.b32.cont [13/16] 0.0, 128
        %932 = vxpose.xlu0.b32.cont [14/16] 0.0, 128
        %933 = vxpose.xlu0.b32.cont [15/16] 0.0, 128
        %934 = vxpose.xlu0.b32.end [16/16] 0.0, 128
        %v935 = vpop.trf.xlu0
        %v936 = vpop.trf.xlu0
        %v937 = vpop.trf.xlu0
        %v938 = vpop.trf.xlu0
        %v939 = vpop.trf.xlu0
        %v940 = vpop.trf.xlu0
        %v941 = vpop.trf.xlu0
        %v942 = vpop.trf.xlu0
        %v943 = vpop.trf.xlu0
        %v944 = vpop.trf.xlu0
        %v945 = vpop.trf.xlu0
        %v946 = vpop.trf.xlu0
        %v947 = vpop.trf.xlu0
        %v948 = vpop.trf.xlu0
        %v949 = vpop.trf.xlu0
        %v950 = vpop.trf.xlu0
        %v951 = vrot.slane %v519, 4
        %v952 = vsel %vm327, %v951, %v455
        %v953 = vrot.slane %v455, 4
        %v954 = vsel %vm327, %v519, %v953
        %v956 = vunpack.c.l.s4 1983009808
        %v957 = vunpack.c.0.s8 %v956
        %v958 = vperm.slane %v952, %v957
        %v960 = vunpack.c.l.s4 1983009808
        %v961 = vunpack.c.0.s8 %v960
        %v962 = vperm.slane %v954, %v961
        %v963 = vrot.slane %v551, 4
        %v964 = vsel %vm327, %v963, %v487
        %v965 = vrot.slane %v487, 4
        %v966 = vsel %vm327, %v551, %v965
        %v968 = vunpack.c.l.s4 1983009808
        %v969 = vunpack.c.0.s8 %v968
        %v970 = vperm.slane %v964, %v969
        %v972 = vunpack.c.l.s4 1983009808
        %v973 = vunpack.c.0.s8 %v972
        %v974 = vperm.slane %v966, %v973
        %v975 = vrot.slane %v647, 4
        %v976 = vsel %vm327, %v975, %v583
        %v977 = vrot.slane %v583, 4
        %v978 = vsel %vm327, %v647, %v977
        %v980 = vunpack.c.l.s4 1983009808
        %v981 = vunpack.c.0.s8 %v980
        %v982 = vperm.slane %v976, %v981
        %v984 = vunpack.c.l.s4 1983009808
        %v985 = vunpack.c.0.s8 %v984
        %v986 = vperm.slane %v978, %v985
        %v987 = vrot.slane %v679, 4
        %v988 = vsel %vm327, %v987, %v615
        %v989 = vrot.slane %v615, 4
        %v990 = vsel %vm327, %v679, %v989
        %v992 = vunpack.c.l.s4 1983009808
        %v993 = vunpack.c.0.s8 %v992
        %v994 = vperm.slane %v988, %v993
        %v996 = vunpack.c.l.s4 1983009808
        %v997 = vunpack.c.0.s8 %v996
        %v998 = vperm.slane %v990, %v997
        %v999 = vrot.slane %v970, 4
        %v1000 = vsel %vm327, %v999, %v958
        %v1001 = vrot.slane %v958, 4
        %v1002 = vsel %vm327, %v970, %v1001
        %v1004 = vunpack.c.l.s4 1934713408
        %v1005 = vunpack.c.0.s8 %v1004
        %v1006 = vperm.slane %v1000, %v1005
        %v1008 = vunpack.c.l.s4 1934713408
        %v1009 = vunpack.c.0.s8 %v1008
        %v1010 = vperm.slane %v1002, %v1009
        %v1011 = vrot.slane %v974, 4
        %v1012 = vsel %vm327, %v1011, %v962
        %v1013 = vrot.slane %v962, 4
        %v1014 = vsel %vm327, %v974, %v1013
        %v1016 = vunpack.c.l.s4 1934713408
        %v1017 = vunpack.c.0.s8 %v1016
        %v1018 = vperm.slane %v1012, %v1017
        %v1020 = vunpack.c.l.s4 1934713408
        %v1021 = vunpack.c.0.s8 %v1020
        %v1022 = vperm.slane %v1014, %v1021
        %v1023 = vrot.slane %v994, 4
        %v1024 = vsel %vm327, %v1023, %v982
        %v1025 = vrot.slane %v982, 4
        %v1026 = vsel %vm327, %v994, %v1025
        %v1028 = vunpack.c.l.s4 1934713408
        %v1029 = vunpack.c.0.s8 %v1028
        %v1030 = vperm.slane %v1024, %v1029
        %v1032 = vunpack.c.l.s4 1934713408
        %v1033 = vunpack.c.0.s8 %v1032
        %v1034 = vperm.slane %v1026, %v1033
        %v1035 = vrot.slane %v998, 4
        %v1036 = vsel %vm327, %v1035, %v986
        %v1037 = vrot.slane %v986, 4
        %v1038 = vsel %vm327, %v998, %v1037
        %v1040 = vunpack.c.l.s4 1934713408
        %v1041 = vunpack.c.0.s8 %v1040
        %v1042 = vperm.slane %v1036, %v1041
        %v1044 = vunpack.c.l.s4 1934713408
        %v1045 = vunpack.c.0.s8 %v1044
        %v1046 = vperm.slane %v1038, %v1045
        %v1047 = vrot.slane %v1030, 4
        %v1048 = vsel %vm327, %v1047, %v1006
        %v1049 = vrot.slane %v1006, 4
        %v1050 = vsel %vm327, %v1030, %v1049
        %v1051 = vrot.slane %v1034, 4
        %v1052 = vsel %vm327, %v1051, %v1010
        %v1053 = vrot.slane %v1010, 4
        %v1054 = vsel %vm327, %v1034, %v1053
        %v1055 = vrot.slane %v1042, 4
        %v1056 = vsel %vm327, %v1055, %v1018
        %v1057 = vrot.slane %v1018, 4
        %v1058 = vsel %vm327, %v1042, %v1057
        %v1059 = vrot.slane %v1046, 4
        %v1060 = vsel %vm327, %v1059, %v1022
        %v1061 = vrot.slane %v1022, 4
        %v1062 = vsel %vm327, %v1046, %v1061
        %v1063 = vrot.slane %v775, 4
        %v1064 = vsel %vm327, %v1063, %v711
        %v1065 = vrot.slane %v711, 4
        %v1066 = vsel %vm327, %v775, %v1065
        %v1068 = vunpack.c.l.s4 1983009808
        %v1069 = vunpack.c.0.s8 %v1068
        %v1070 = vperm.slane %v1064, %v1069
        %v1072 = vunpack.c.l.s4 1983009808
        %v1073 = vunpack.c.0.s8 %v1072
        %v1074 = vperm.slane %v1066, %v1073
        %v1075 = vrot.slane %v807, 4
        %v1076 = vsel %vm327, %v1075, %v743
        %v1077 = vrot.slane %v743, 4
        %v1078 = vsel %vm327, %v807, %v1077
        %v1080 = vunpack.c.l.s4 1983009808
        %v1081 = vunpack.c.0.s8 %v1080
        %v1082 = vperm.slane %v1076, %v1081
        %v1084 = vunpack.c.l.s4 1983009808
        %v1085 = vunpack.c.0.s8 %v1084
        %v1086 = vperm.slane %v1078, %v1085
        %v1087 = vrot.slane %v903, 4
        %v1088 = vsel %vm327, %v1087, %v839
        %v1089 = vrot.slane %v839, 4
        %v1090 = vsel %vm327, %v903, %v1089
        %v1092 = vunpack.c.l.s4 1983009808
        %v1093 = vunpack.c.0.s8 %v1092
        %v1094 = vperm.slane %v1088, %v1093
        %v1096 = vunpack.c.l.s4 1983009808
        %v1097 = vunpack.c.0.s8 %v1096
        %v1098 = vperm.slane %v1090, %v1097
        %v1099 = vrot.slane %v935, 4
        %v1100 = vsel %vm327, %v1099, %v871
        %v1101 = vrot.slane %v871, 4
        %v1102 = vsel %vm327, %v935, %v1101
        %v1104 = vunpack.c.l.s4 1983009808
        %v1105 = vunpack.c.0.s8 %v1104
        %v1106 = vperm.slane %v1100, %v1105
        %v1108 = vunpack.c.l.s4 1983009808
        %v1109 = vunpack.c.0.s8 %v1108
        %v1110 = vperm.slane %v1102, %v1109
        %v1111 = vrot.slane %v1082, 4
        %v1112 = vsel %vm327, %v1111, %v1070
        %v1113 = vrot.slane %v1070, 4
        %v1114 = vsel %vm327, %v1082, %v1113
        %v1116 = vunpack.c.l.s4 1934713408
        %v1117 = vunpack.c.0.s8 %v1116
        %v1118 = vperm.slane %v1112, %v1117
        %v1120 = vunpack.c.l.s4 1934713408
        %v1121 = vunpack.c.0.s8 %v1120
        %v1122 = vperm.slane %v1114, %v1121
        %v1123 = vrot.slane %v1086, 4
        %v1124 = vsel %vm327, %v1123, %v1074
        %v1125 = vrot.slane %v1074, 4
        %v1126 = vsel %vm327, %v1086, %v1125
        %v1128 = vunpack.c.l.s4 1934713408
        %v1129 = vunpack.c.0.s8 %v1128
        %v1130 = vperm.slane %v1124, %v1129
        %v1132 = vunpack.c.l.s4 1934713408
        %v1133 = vunpack.c.0.s8 %v1132
        %v1134 = vperm.slane %v1126, %v1133
        %v1135 = vrot.slane %v1106, 4
        %v1136 = vsel %vm327, %v1135, %v1094
        %v1137 = vrot.slane %v1094, 4
        %v1138 = vsel %vm327, %v1106, %v1137
        %v1140 = vunpack.c.l.s4 1934713408
        %v1141 = vunpack.c.0.s8 %v1140
        %v1142 = vperm.slane %v1136, %v1141
        %v1144 = vunpack.c.l.s4 1934713408
        %v1145 = vunpack.c.0.s8 %v1144
        %v1146 = vperm.slane %v1138, %v1145
        %v1147 = vrot.slane %v1110, 4
        %v1148 = vsel %vm327, %v1147, %v1098
        %v1149 = vrot.slane %v1098, 4
        %v1150 = vsel %vm327, %v1110, %v1149
        %v1152 = vunpack.c.l.s4 1934713408
        %v1153 = vunpack.c.0.s8 %v1152
        %v1154 = vperm.slane %v1148, %v1153
        %v1156 = vunpack.c.l.s4 1934713408
        %v1157 = vunpack.c.0.s8 %v1156
        %v1158 = vperm.slane %v1150, %v1157
        %v1159 = vrot.slane %v1142, 4
        %v1160 = vsel %vm327, %v1159, %v1118
        %v1161 = vrot.slane %v1118, 4
        %v1162 = vsel %vm327, %v1142, %v1161
        %v1163 = vrot.slane %v1146, 4
        %v1164 = vsel %vm327, %v1163, %v1122
        %v1165 = vrot.slane %v1122, 4
        %v1166 = vsel %vm327, %v1146, %v1165
        %v1167 = vrot.slane %v1154, 4
        %v1168 = vsel %vm327, %v1167, %v1130
        %v1169 = vrot.slane %v1130, 4
        %v1170 = vsel %vm327, %v1154, %v1169
        %v1171 = vrot.slane %v1158, 4
        %v1172 = vsel %vm327, %v1171, %v1134
        %v1173 = vrot.slane %v1134, 4
        %v1174 = vsel %vm327, %v1158, %v1173
        %v1175 = vrot.slane %v520, 4
        %v1176 = vsel %vm327, %v1175, %v456
        %v1177 = vrot.slane %v456, 4
        %v1178 = vsel %vm327, %v520, %v1177
        %v1180 = vunpack.c.l.s4 1983009808
        %v1181 = vunpack.c.0.s8 %v1180
        %v1182 = vperm.slane %v1176, %v1181
        %v1184 = vunpack.c.l.s4 1983009808
        %v1185 = vunpack.c.0.s8 %v1184
        %v1186 = vperm.slane %v1178, %v1185
        %v1187 = vrot.slane %v552, 4
        %v1188 = vsel %vm327, %v1187, %v488
        %v1189 = vrot.slane %v488, 4
        %v1190 = vsel %vm327, %v552, %v1189
        %v1192 = vunpack.c.l.s4 1983009808
        %v1193 = vunpack.c.0.s8 %v1192
        %v1194 = vperm.slane %v1188, %v1193
        %v1196 = vunpack.c.l.s4 1983009808
        %v1197 = vunpack.c.0.s8 %v1196
        %v1198 = vperm.slane %v1190, %v1197
        %v1199 = vrot.slane %v648, 4
        %v1200 = vsel %vm327, %v1199, %v584
        %v1201 = vrot.slane %v584, 4
        %v1202 = vsel %vm327, %v648, %v1201
        %v1204 = vunpack.c.l.s4 1983009808
        %v1205 = vunpack.c.0.s8 %v1204
        %v1206 = vperm.slane %v1200, %v1205
        %v1208 = vunpack.c.l.s4 1983009808
        %v1209 = vunpack.c.0.s8 %v1208
        %v1210 = vperm.slane %v1202, %v1209
        %v1211 = vrot.slane %v680, 4
        %v1212 = vsel %vm327, %v1211, %v616
        %v1213 = vrot.slane %v616, 4
        %v1214 = vsel %vm327, %v680, %v1213
        %v1216 = vunpack.c.l.s4 1983009808
        %v1217 = vunpack.c.0.s8 %v1216
        %v1218 = vperm.slane %v1212, %v1217
        %v1220 = vunpack.c.l.s4 1983009808
        %v1221 = vunpack.c.0.s8 %v1220
        %v1222 = vperm.slane %v1214, %v1221
        %v1223 = vrot.slane %v1194, 4
        %v1224 = vsel %vm327, %v1223, %v1182
        %v1225 = vrot.slane %v1182, 4
        %v1226 = vsel %vm327, %v1194, %v1225
        %v1228 = vunpack.c.l.s4 1934713408
        %v1229 = vunpack.c.0.s8 %v1228
        %v1230 = vperm.slane %v1224, %v1229
        %v1232 = vunpack.c.l.s4 1934713408
        %v1233 = vunpack.c.0.s8 %v1232
        %v1234 = vperm.slane %v1226, %v1233
        %v1235 = vrot.slane %v1198, 4
        %v1236 = vsel %vm327, %v1235, %v1186
        %v1237 = vrot.slane %v1186, 4
        %v1238 = vsel %vm327, %v1198, %v1237
        %v1240 = vunpack.c.l.s4 1934713408
        %v1241 = vunpack.c.0.s8 %v1240
        %v1242 = vperm.slane %v1236, %v1241
        %v1244 = vunpack.c.l.s4 1934713408
        %v1245 = vunpack.c.0.s8 %v1244
        %v1246 = vperm.slane %v1238, %v1245
        %v1247 = vrot.slane %v1218, 4
        %v1248 = vsel %vm327, %v1247, %v1206
        %v1249 = vrot.slane %v1206, 4
        %v1250 = vsel %vm327, %v1218, %v1249
        %v1252 = vunpack.c.l.s4 1934713408
        %v1253 = vunpack.c.0.s8 %v1252
        %v1254 = vperm.slane %v1248, %v1253
        %v1256 = vunpack.c.l.s4 1934713408
        %v1257 = vunpack.c.0.s8 %v1256
        %v1258 = vperm.slane %v1250, %v1257
        %v1259 = vrot.slane %v1222, 4
        %v1260 = vsel %vm327, %v1259, %v1210
        %v1261 = vrot.slane %v1210, 4
        %v1262 = vsel %vm327, %v1222, %v1261
        %v1264 = vunpack.c.l.s4 1934713408
        %v1265 = vunpack.c.0.s8 %v1264
        %v1266 = vperm.slane %v1260, %v1265
        %v1268 = vunpack.c.l.s4 1934713408
        %v1269 = vunpack.c.0.s8 %v1268
        %v1270 = vperm.slane %v1262, %v1269
        %v1271 = vrot.slane %v1254, 4
        %v1272 = vsel %vm327, %v1271, %v1230
        %v1273 = vrot.slane %v1230, 4
        %v1274 = vsel %vm327, %v1254, %v1273
        %v1275 = vrot.slane %v1258, 4
        %v1276 = vsel %vm327, %v1275, %v1234
        %v1277 = vrot.slane %v1234, 4
        %v1278 = vsel %vm327, %v1258, %v1277
        %v1279 = vrot.slane %v1266, 4
        %v1280 = vsel %vm327, %v1279, %v1242
        %v1281 = vrot.slane %v1242, 4
        %v1282 = vsel %vm327, %v1266, %v1281
        %v1283 = vrot.slane %v1270, 4
        %v1284 = vsel %vm327, %v1283, %v1246
        %v1285 = vrot.slane %v1246, 4
        %v1286 = vsel %vm327, %v1270, %v1285
        %v1287 = vrot.slane %v776, 4
        %v1288 = vsel %vm327, %v1287, %v712
        %v1289 = vrot.slane %v712, 4
        %v1290 = vsel %vm327, %v776, %v1289
        %v1292 = vunpack.c.l.s4 1983009808
        %v1293 = vunpack.c.0.s8 %v1292
        %v1294 = vperm.slane %v1288, %v1293
        %v1296 = vunpack.c.l.s4 1983009808
        %v1297 = vunpack.c.0.s8 %v1296
        %v1298 = vperm.slane %v1290, %v1297
        %v1299 = vrot.slane %v808, 4
        %v1300 = vsel %vm327, %v1299, %v744
        %v1301 = vrot.slane %v744, 4
        %v1302 = vsel %vm327, %v808, %v1301
        %v1304 = vunpack.c.l.s4 1983009808
        %v1305 = vunpack.c.0.s8 %v1304
        %v1306 = vperm.slane %v1300, %v1305
        %v1308 = vunpack.c.l.s4 1983009808
        %v1309 = vunpack.c.0.s8 %v1308
        %v1310 = vperm.slane %v1302, %v1309
        %v1311 = vrot.slane %v904, 4
        %v1312 = vsel %vm327, %v1311, %v840
        %v1313 = vrot.slane %v840, 4
        %v1314 = vsel %vm327, %v904, %v1313
        %v1316 = vunpack.c.l.s4 1983009808
        %v1317 = vunpack.c.0.s8 %v1316
        %v1318 = vperm.slane %v1312, %v1317
        %v1320 = vunpack.c.l.s4 1983009808
        %v1321 = vunpack.c.0.s8 %v1320
        %v1322 = vperm.slane %v1314, %v1321
        %v1323 = vrot.slane %v936, 4
        %v1324 = vsel %vm327, %v1323, %v872
        %v1325 = vrot.slane %v872, 4
        %v1326 = vsel %vm327, %v936, %v1325
        %v1328 = vunpack.c.l.s4 1983009808
        %v1329 = vunpack.c.0.s8 %v1328
        %v1330 = vperm.slane %v1324, %v1329
        %v1332 = vunpack.c.l.s4 1983009808
        %v1333 = vunpack.c.0.s8 %v1332
        %v1334 = vperm.slane %v1326, %v1333
        %v1335 = vrot.slane %v1306, 4
        %v1336 = vsel %vm327, %v1335, %v1294
        %v1337 = vrot.slane %v1294, 4
        %v1338 = vsel %vm327, %v1306, %v1337
        %v1340 = vunpack.c.l.s4 1934713408
        %v1341 = vunpack.c.0.s8 %v1340
        %v1342 = vperm.slane %v1336, %v1341
        %v1344 = vunpack.c.l.s4 1934713408
        %v1345 = vunpack.c.0.s8 %v1344
        %v1346 = vperm.slane %v1338, %v1345
        %v1347 = vrot.slane %v1310, 4
        %v1348 = vsel %vm327, %v1347, %v1298
        %v1349 = vrot.slane %v1298, 4
        %v1350 = vsel %vm327, %v1310, %v1349
        %v1352 = vunpack.c.l.s4 1934713408
        %v1353 = vunpack.c.0.s8 %v1352
        %v1354 = vperm.slane %v1348, %v1353
        %v1356 = vunpack.c.l.s4 1934713408
        %v1357 = vunpack.c.0.s8 %v1356
        %v1358 = vperm.slane %v1350, %v1357
        %v1359 = vrot.slane %v1330, 4
        %v1360 = vsel %vm327, %v1359, %v1318
        %v1361 = vrot.slane %v1318, 4
        %v1362 = vsel %vm327, %v1330, %v1361
        %v1364 = vunpack.c.l.s4 1934713408
        %v1365 = vunpack.c.0.s8 %v1364
        %v1366 = vperm.slane %v1360, %v1365
        %v1368 = vunpack.c.l.s4 1934713408
        %v1369 = vunpack.c.0.s8 %v1368
        %v1370 = vperm.slane %v1362, %v1369
        %v1371 = vrot.slane %v1334, 4
        %v1372 = vsel %vm327, %v1371, %v1322
        %v1373 = vrot.slane %v1322, 4
        %v1374 = vsel %vm327, %v1334, %v1373
        %v1376 = vunpack.c.l.s4 1934713408
        %v1377 = vunpack.c.0.s8 %v1376
        %v1378 = vperm.slane %v1372, %v1377
        %v1380 = vunpack.c.l.s4 1934713408
        %v1381 = vunpack.c.0.s8 %v1380
        %v1382 = vperm.slane %v1374, %v1381
        %v1383 = vrot.slane %v1366, 4
        %v1384 = vsel %vm327, %v1383, %v1342
        %v1385 = vrot.slane %v1342, 4
        %v1386 = vsel %vm327, %v1366, %v1385
        %v1387 = vrot.slane %v1370, 4
        %v1388 = vsel %vm327, %v1387, %v1346
        %v1389 = vrot.slane %v1346, 4
        %v1390 = vsel %vm327, %v1370, %v1389
        %v1391 = vrot.slane %v1378, 4
        %v1392 = vsel %vm327, %v1391, %v1354
        %v1393 = vrot.slane %v1354, 4
        %v1394 = vsel %vm327, %v1378, %v1393
        %v1395 = vrot.slane %v1382, 4
        %v1396 = vsel %vm327, %v1395, %v1358
        %v1397 = vrot.slane %v1358, 4
        %v1398 = vsel %vm327, %v1382, %v1397
        %vm1399 = vcmask 31744
        %1400 = vst.msk [vmem:[%s187] sm:$0xff] %vm1399, %v1048
        %1401 = vst.msk [vmem:[%s187 + $0x8] sm:$0xff] %vm1399, %v1160
        %1402 = vst.msk [vmem:[%s187 + $0x10] sm:$0xff] %vm1399, %v1050
        %1403 = vst.msk [vmem:[%s187 + $0x18] sm:$0xff] %vm1399, %v1162
        %1404 = vst.msk [vmem:[%s187 + $0x20] sm:$0xff] %vm1399, %v1052
        %1405 = vst.msk [vmem:[%s187 + $0x28] sm:$0xff] %vm1399, %v1164
        %1406 = vst.msk [vmem:[%s187 + $0x30] sm:$0xff] %vm1399, %v1054
        %1407 = vst.msk [vmem:[%s187 + $0x38] sm:$0xff] %vm1399, %v1166
        %1408 = vst.msk [vmem:[%s187 + $0x40] sm:$0xff] %vm1399, %v1056
        %1409 = vst.msk [vmem:[%s187 + $0x48] sm:$0xff] %vm1399, %v1168
        %1410 = vst.msk [vmem:[%s187 + $0x50] sm:$0xff] %vm1399, %v1058
        %1411 = vst.msk [vmem:[%s187 + $0x58] sm:$0xff] %vm1399, %v1170
        %1412 = vst.msk [vmem:[%s187 + $0x60] sm:$0xff] %vm1399, %v1060
        %1413 = vst.msk [vmem:[%s187 + $0x68] sm:$0xff] %vm1399, %v1172
        %1414 = vst.msk [vmem:[%s187 + $0x70] sm:$0xff] %vm1399, %v1062
        %1415 = vst.msk [vmem:[%s187 + $0x78] sm:$0xff] %vm1399, %v1174
        %1416 = vst.msk [vmem:[%s187 + $0x80] sm:$0xff] %vm1399, %v1272
        %1417 = vst.msk [vmem:[%s187 + $0x88] sm:$0xff] %vm1399, %v1384
        %1418 = vst.msk [vmem:[%s187 + $0x90] sm:$0xff] %vm1399, %v1274
        %1419 = vst.msk [vmem:[%s187 + $0x98] sm:$0xff] %vm1399, %v1386
        %1420 = vst.msk [vmem:[%s187 + $0xa0] sm:$0xff] %vm1399, %v1276
        %1421 = vst.msk [vmem:[%s187 + $0xa8] sm:$0xff] %vm1399, %v1388
        %1422 = vst.msk [vmem:[%s187 + $0xb0] sm:$0xff] %vm1399, %v1278
        %1423 = vst.msk [vmem:[%s187 + $0xb8] sm:$0xff] %vm1399, %v1390
        %1424 = vst.msk [vmem:[%s187 + $0xc0] sm:$0xff] %vm1399, %v1280
        %1425 = vst.msk [vmem:[%s187 + $0xc8] sm:$0xff] %vm1399, %v1392
        %1426 = vst.msk [vmem:[%s187 + $0xd0] sm:$0xff] %vm1399, %v1282
        %1427 = vst.msk [vmem:[%s187 + $0xd8] sm:$0xff] %vm1399, %v1394
        %1428 = vst.msk [vmem:[%s187 + $0xe0] sm:$0xff] %vm1399, %v1284
        %1429 = vst.msk [vmem:[%s187 + $0xe8] sm:$0xff] %vm1399, %v1396
        %1430 = vst.msk [vmem:[%s187 + $0xf0] sm:$0xff] %vm1399, %v1286
        %1431 = vst.msk [vmem:[%s187 + $0xf8] sm:$0xff] %vm1399, %v1398
        %s1432 = smul.u32 16, %s21
        %s1433 = smul.u32 2, %s22
        %p1434 = scmp.lt.s32.totalorder %s20, 1
        %s1435 = scalar_select %p1434, %s20, 1
        %p1436 = scmp.lt.s32.totalorder %s1432, 15
        %s1437 = scalar_select %p1436, %s1432, 15
        %p1438 = scmp.lt.s32.totalorder %s1433, 1
        %s1439 = scalar_select %p1438, %s1433, 1
        %s1440 = smul.addr %s1437, 2
        %s1441 = sadd.s32 %s1439, %s1440
        %s1442 = smul.addr %s1435, 32
        %s1443 = sadd.s32 %s1441, %s1442
        %s1444 = smul.addr %s1443, 8
        %s1445 = scalar_lea.vmem %s1, %s1444
        // Predicated region
        $region29: #{tpu_custom_call.1} parent=23 // pred_check
          %p1446 = pneg %p86
        $region30: #{tpu_custom_call.1} parent=23 // pred_check_branch
          %1448 = sbr.rel (%p1446) target = $region32
        $region31: #{tpu_custom_call.1} parent=23 // pred_region
          %s1449 = smul.u32 16, %s21
          %s1450 = smul.u32 2, %s22
        $region32: #{tpu_custom_call.1} parent=23 // pred_fallthru
          _
      $region24: #{tpu_custom_call.1} parent=5 // pred_fallthru
        _
      %p1451 = scmp.le.s32.totalorder 2, %s10
      // Predicated region
      $region33: #{tpu_custom_call.1} parent=5 // pred_check
        %p1452 = pneg %p1451
      $region34: #{tpu_custom_call.1} parent=5 // pred_check_branch
        %1454 = sbr.rel (%p1452) target = $region36
      $region35: #{tpu_custom_call.1} parent=5 // pred_region
        %s1455 = ssub.s32 %s10, 2
        // Predicated region
        $region37: #{tpu_custom_call.1} parent=35 // pred_check
          %p1456 = pneg %p92
        $region38: #{tpu_custom_call.1} parent=35 // pred_check_branch
          %1458 = sbr.rel (%p1456) target = $region40
        $region39: #{tpu_custom_call.1} parent=35 // pred_region
          %s1459 = smul.u32 16, %s24
          %s1460 = smul.u32 2, %s25
          %p1461 = scmp.lt.s32.totalorder %s23, 1
          %s1462 = scalar_select %p1461, %s23, 1
          %p1463 = scmp.lt.s32.totalorder %s1459, 15
          %s1464 = scalar_select %p1463, %s1459, 15
          %p1465 = scmp.lt.s32.totalorder %s1460, 1
          %s1466 = scalar_select %p1465, %s1460, 1
          %s1467 = smul.addr %s1464, 2
          %s1468 = sadd.s32 %s1466, %s1467
          %s1469 = smul.addr %s1462, 32
          %s1470 = sadd.s32 %s1468, %s1469
          %s1471 = smul.addr %s1470, 8
          %s1472 = scalar_lea.vmem %s1, %s1471
        $region40: #{tpu_custom_call.1} parent=35 // pred_fallthru
          _
      $region36: #{tpu_custom_call.1} parent=5 // pred_fallthru
        _
    $region6: #{tpu_custom_call.1} parent=1 // loop_footer
      %s14 = sadd.s32 1, %s10
    $region7: #{tpu_custom_call.1} parent=1 // loop_footer_branch
      %9 = sbr.rel target = $region3
    $region8: #{tpu_custom_call.1} parent=1 // loop_exit
      _
    %1473 = vsyncpa [#allocation3], 1
    %s1474 = scalar_lea.sflag [#allocation3], 1
    %1475 = vsyncpa %s1474, 1

</llo_original>
